<compile_context>
chip_gen: v6e
topology: v6e:2x2x1
jax: 0.10.0
libtpu: 0.0.40
codegen_flags: <defaults>
</compile_context>

<pallas_src>
import jax
import jax.numpy as jnp
from jax.experimental import pallas as pl
from jax.experimental.pallas import tpu as pltpu

# ---- config (mirrors cfg.gnn.*) -------------------------------------------
NUM_SAMPLES = 4          # cfg.gnn.num_samples (streams identical in eval)
LAYERS_MP = 2            # cfg.gnn.layers_mp
DIM_IN = 8               # raw node feature dim
DIM_INNER = 32           # cfg.gnn.dim_inner
DIM_OUT = 4              # task output dim
N_NODES = 16             # nodes per graph in the example batch
NUM_GRAPHS = 64          # graphs in the example batch
GRAPHS_PER_BLOCK = 16    # graphs fused into one grid step
BLOCK_ROWS = GRAPHS_PER_BLOCK * N_NODES   # 256 node rows / grid step (fills MXU M)
DIM_OUT_PAD = 128        # lane-dense padded head output width
# cfg.gnn.jk = False, subgraph_pooling = 'mean', residual = True, eval mode.


# ---- kernel ----------------------------------------------------------------
def colour_gnn_kernel(a_ref, x_ref, enc_w_ref, enc_b_ref,
                      conv_w_ref, conv_b_ref, head_w_ref, head_b_ref,
                      out_ref):
    a = a_ref[...]                       # [256, 256] f32 block-diag batched adjacency
    enc_b = enc_b_ref[...]               # bias reads hoisted out of the layer loop
    conv_b = conv_b_ref[...]             # [L, 1, D] f32

    # FeatureEncoder: bf16 MXU pass, f32 accumulation.
    h = jnp.dot(x_ref[...].astype(jnp.bfloat16), enc_w_ref[...],
                preferred_element_type=jnp.float32) + enc_b          # [256, D] f32

    # GCNConvLayerColour stack (residual + ReLU), static unroll over layers.
    for l in range(LAYERS_MP):
        ah = jnp.dot(a, h, preferred_element_type=jnp.float32)       # aggregate
        z = jnp.dot(ah.astype(jnp.bfloat16), conv_w_ref[l],
                    preferred_element_type=jnp.float32) + conv_b[l]  # transform
        h = h + jnp.maximum(z, 0.0)                                   # ReLU + residual (f32 VPU)

    # MeanAveraging over identical sample streams is the identity; post_mp head.
    # head_w is zero-padded to 128 lanes so the store is unmasked (lane-dense).
    out_ref[...] = jnp.dot(h.astype(jnp.bfloat16), head_w_ref[...],
                           preferred_element_type=jnp.float32) + head_b_ref[...]


# ---- wrapper ----------------------------------------------------------------
def colour_gnn_forward(a_batched, x_all, packed_params):
    enc_w, enc_b, conv_w, conv_b, head_w, head_b = packed_params
    total_rows = x_all.shape[0]
    assert total_rows % BLOCK_ROWS == 0
    num_blocks = total_rows // BLOCK_ROWS

    operands = (a_batched, x_all, enc_w, enc_b, conv_w, conv_b, head_w, head_b)

    flops_per_block = 2 * (BLOCK_ROWS * DIM_IN * DIM_INNER
                           + LAYERS_MP * (BLOCK_ROWS * BLOCK_ROWS * DIM_INNER
                                          + BLOCK_ROWS * DIM_INNER * DIM_INNER)
                           + BLOCK_ROWS * DIM_INNER * DIM_OUT_PAD)
    bytes_accessed = (sum(int(op.size) * op.dtype.itemsize for op in operands)
                      + total_rows * DIM_OUT_PAD * 4)

    in_specs = [
        # per-graph-block tiles (double-buffered by the default pipeline)
        pl.BlockSpec((BLOCK_ROWS, BLOCK_ROWS), lambda i: (i, 0)),              # A (block-diag)
        pl.BlockSpec((BLOCK_ROWS, DIM_IN), lambda i: (i, 0)),                  # x
        # weights: constant index_map -> fetched once, VMEM-resident across the grid
        pl.BlockSpec((DIM_IN, DIM_INNER), lambda i: (0, 0)),                   # enc_w  (bf16)
        pl.BlockSpec((1, DIM_INNER), lambda i: (0, 0)),                        # enc_b  (f32)
        pl.BlockSpec((LAYERS_MP, DIM_INNER, DIM_INNER), lambda i: (0, 0, 0)),  # conv_w (bf16)
        pl.BlockSpec((LAYERS_MP, 1, DIM_INNER), lambda i: (0, 0, 0)),          # conv_b (f32)
        pl.BlockSpec((DIM_INNER, DIM_OUT_PAD), lambda i: (0, 0)),              # head_w (bf16, padded)
        pl.BlockSpec((1, DIM_OUT_PAD), lambda i: (0, 0)),                      # head_b (f32, padded)
    ]
    out_specs = pl.BlockSpec((BLOCK_ROWS, DIM_OUT_PAD), lambda i: (i, 0))

    out = pl.pallas_call(
        colour_gnn_kernel,
        out_shape=jax.ShapeDtypeStruct((total_rows, DIM_OUT_PAD), jnp.float32),
        grid=(num_blocks,),
        in_specs=in_specs,
        out_specs=out_specs,
        compiler_params=pltpu.CompilerParams(
            dimension_semantics=("parallel",)),   # shards graph blocks across v7x's 2 TCs
        cost_estimate=pl.CostEstimate(flops=num_blocks * flops_per_block,
                                      transcendentals=0,
                                      bytes_accessed=bytes_accessed),
    )(*operands)
    return out[:, :DIM_OUT]


# ---- host-side parameter packing (free constant folding) -------------------
def pack_params(enc_w, enc_b, conv_w, conv_b, head_w, head_b):
    # Sample streams identical in eval -> compute at D = dim_inner (S collapsed);
    # MeanAveraging of identical streams is the identity, so head_w is unchanged.
    enc_w_p = enc_w.astype(jnp.bfloat16)
    conv_w_p = conv_w.astype(jnp.bfloat16)
    head_w_p = jnp.pad(head_w, ((0, 0), (0, DIM_OUT_PAD - head_w.shape[1])))
    head_w_p = head_w_p.astype(jnp.bfloat16)
    head_b_p = jnp.pad(head_b, ((0, 0), (0, DIM_OUT_PAD - head_b.shape[1])))
    return enc_w_p, enc_b, conv_w_p, conv_b, head_w_p, head_b_p


# ---- plain-JAX glue: graph construction / GCN normalization ----------------
def gcn_normalize(edge_index, n):
    src, dst = edge_index
    adj = jnp.zeros((n, n), jnp.float32).at[src, dst].set(1.0)
    adj = jnp.maximum(adj, adj.T)                             # undirected
    adj = jnp.maximum(adj, jnp.eye(n, dtype=jnp.float32))     # exactly one self loop / node
    deg = adj.sum(axis=1)
    dinv = 1.0 / jnp.sqrt(deg)
    return adj * dinv[:, None] * dinv[None, :]                # D^{-1/2} A D^{-1/2}


def make_graph(key):
    kx, k1, k2 = jax.random.split(key, 3)
    x = jax.random.normal(kx, (N_NODES, DIM_IN), jnp.float32)
    ring_src = jnp.arange(N_NODES, dtype=jnp.int32)
    ring_dst = (ring_src + 1) % N_NODES
    rnd_src = jax.random.randint(k1, (16,), 0, N_NODES, dtype=jnp.int32)
    rnd_dst = jax.random.randint(k2, (16,), 0, N_NODES, dtype=jnp.int32)
    edge_index = jnp.stack([jnp.concatenate([ring_src, rnd_src]),
                            jnp.concatenate([ring_dst, rnd_dst])])
    return x, gcn_normalize(edge_index, N_NODES)


def build_block_diag_adjacency(adjs, graphs_per_block):
    """[G, n, n] per-graph adjacencies -> [G*n, graphs_per_block*n] stacked block-diagonals."""
    g, n, _ = adjs.shape
    nb = g // graphs_per_block
    blocks = adjs.reshape(nb, graphs_per_block, n, n)
    eye = jnp.eye(graphs_per_block, dtype=adjs.dtype)
    bd = eye[None, :, None, :, None] * blocks[:, :, :, None, :]   # [nb, gb, n, gb, n]
    return bd.reshape(nb * graphs_per_block * n, graphs_per_block * n)


def glorot(k, shape):
    fan_in, fan_out = shape[-2], shape[-1]
    lim = (6.0 / (fan_in + fan_out)) ** 0.5
    return jax.random.uniform(k, shape, jnp.float32, -lim, lim)


# ---- pure-JAX reference (original per-sample formulation) -------------------
def colour_gnn_reference(adjs, xs, params, *, weights_bf16):
    """Per-graph, per-sample ColourGNN forward. weights_bf16 mirrors the kernel's
    mixed precision (weights + matmul LHS in bf16, f32 accumulation)."""
    enc_w, enc_b, conv_w, conv_b, head_w, head_b = params
    hp = jax.lax.Precision.HIGHEST
    cast = (lambda t: t.astype(jnp.bfloat16)) if weights_bf16 else (lambda t: t)

    def wdot(x, w):
        return jnp.dot(cast(x), cast(w), precision=hp,
                       preferred_element_type=jnp.float32)

    def single_graph(a, x):
        h0 = wdot(x, enc_w) + enc_b
        hs = [h0 for _ in range(NUM_SAMPLES)]              # x.repeat((1, S)) streams
        for l in range(LAYERS_MP):
            hs = [h + jnp.maximum(
                      wdot(jnp.dot(a, h, precision=hp,
                                   preferred_element_type=jnp.float32), conv_w[l])
                      + conv_b[l], 0.0)
                  for h in hs]
        h_mean = sum(hs) / NUM_SAMPLES                      # MeanAveraging readout
        return wdot(h_mean, head_w) + head_b                # post_mp head

    out = jax.vmap(single_graph)(adjs, xs)                  # [G, n, dim_out]
    return out.reshape(-1, head_w.shape[1])


if __name__ == "__main__":
    key = jax.random.PRNGKey(0)
    k_graphs, k_enc, k_conv, k_head = jax.random.split(key, 4)

    # deterministic batch of graphs: ring + random chords each
    graph_keys = jax.random.split(k_graphs, NUM_GRAPHS)
    xs, adjs = jax.vmap(make_graph)(graph_keys)                  # [G,16,8], [G,16,16]
    x_all = xs.reshape(NUM_GRAPHS * N_NODES, DIM_IN)             # [1024, 8]
    a_batched = build_block_diag_adjacency(adjs, GRAPHS_PER_BLOCK)  # [1024, 256]

    # deterministic parameters (shapes implied by __init__)
    enc_w = glorot(k_enc, (DIM_IN, DIM_INNER))
    enc_b = jnp.zeros((1, DIM_INNER), jnp.float32)
    conv_w = glorot(k_conv, (LAYERS_MP, DIM_INNER, DIM_INNER))
    conv_b = jnp.zeros((LAYERS_MP, 1, DIM_INNER), jnp.float32)
    head_w = glorot(k_head, (DIM_INNER, DIM_OUT))
    head_b = jnp.zeros((1, DIM_OUT), jnp.float32)
    raw_params = (enc_w, enc_b, conv_w, conv_b, head_w, head_b)

    packed = pack_params(*raw_params)
    out = colour_gnn_forward(a_batched, x_all, packed)
    jax.block_until_ready(out)
    assert out.shape == (NUM_GRAPHS * N_NODES, DIM_OUT)

    # tight check vs same-mixed-precision per-sample reference (structure/semantics)
    ref_mixed = colour_gnn_reference(adjs, xs, raw_params, weights_bf16=True)
    assert jnp.allclose(out, ref_mixed, rtol=1e-2, atol=1e-2), "mismatch vs mixed-precision reference"
    # looser check vs full-f32 HIGHEST reference (numerics sanity for bf16 weights)
    ref_f32 = colour_gnn_reference(adjs, xs, raw_params, weights_bf16=False)
    assert jnp.allclose(out, ref_f32, rtol=5e-2, atol=5e-2), "mismatch vs f32 reference"

    print("KERNEL_OK")
</pallas_src>

<mosaic_0001>
module attributes {stable_mosaic.version = 11 : i64} {
  func.func @colour_gnn_kernel(%arg0: i32, %arg1: memref<256x256xf32, #tpu.memory_space<vmem>>, %arg2: memref<256x8xf32, #tpu.memory_space<vmem>>, %arg3: memref<8x32xbf16, #tpu.memory_space<vmem>>, %arg4: memref<1x32xf32, #tpu.memory_space<vmem>>, %arg5: memref<2x32x32xbf16, #tpu.memory_space<vmem>>, %arg6: memref<2x1x32xf32, #tpu.memory_space<vmem>>, %arg7: memref<32x128xbf16, #tpu.memory_space<vmem>>, %arg8: memref<1x128xf32, #tpu.memory_space<vmem>>, %arg9: memref<256x128xf32, #tpu.memory_space<vmem>>) attributes {dimension_semantics = [#tpu.dimension_semantics<parallel>], iteration_bounds = array<i64: 4>, scalar_prefetch = 0 : i64, scratch_operands = 0 : i64, tpu.core_type = #tpu.core_type<tc>, window_params = [{transform_indices = @transform_0, window_bounds = array<i64: 256, 256>}, {transform_indices = @transform_1, window_bounds = array<i64: 256, 8>}, {pipeline_mode = #tpu.pipeline_mode<synchronous>, transform_indices = @transform_2, window_bounds = array<i64: 8, 32>}, {pipeline_mode = #tpu.pipeline_mode<synchronous>, transform_indices = @transform_3, window_bounds = array<i64: 1, 32>}, {pipeline_mode = #tpu.pipeline_mode<synchronous>, transform_indices = @transform_4, window_bounds = array<i64: 2, 32, 32>}, {pipeline_mode = #tpu.pipeline_mode<synchronous>, transform_indices = @transform_5, window_bounds = array<i64: 2, 1, 32>}, {pipeline_mode = #tpu.pipeline_mode<synchronous>, transform_indices = @transform_6, window_bounds = array<i64: 32, 128>}, {pipeline_mode = #tpu.pipeline_mode<synchronous>, transform_indices = @transform_7, window_bounds = array<i64: 1, 128>}, {transform_indices = @transform_8, window_bounds = array<i64: 256, 128>}]} {
    %c0 = arith.constant 0 : index
    %c0_0 = arith.constant 0 : index
    %0 = vector.load %arg1[%c0, %c0_0] : memref<256x256xf32, #tpu.memory_space<vmem>>, vector<256x256xf32>
    %c0_1 = arith.constant 0 : index
    %c0_2 = arith.constant 0 : index
    %1 = vector.load %arg4[%c0_1, %c0_2] : memref<1x32xf32, #tpu.memory_space<vmem>>, vector<1x32xf32>
    %c0_3 = arith.constant 0 : index
    %c0_4 = arith.constant 0 : index
    %c0_5 = arith.constant 0 : index
    %2 = vector.load %arg6[%c0_3, %c0_4, %c0_5] : memref<2x1x32xf32, #tpu.memory_space<vmem>>, vector<2x1x32xf32>
    %c0_6 = arith.constant 0 : index
    %c0_7 = arith.constant 0 : index
    %3 = vector.load %arg2[%c0_6, %c0_7] : memref<256x8xf32, #tpu.memory_space<vmem>>, vector<256x8xf32>
    %4 = arith.truncf %3 : vector<256x8xf32> to vector<256x8xbf16>
    %c0_8 = arith.constant 0 : index
    %c0_9 = arith.constant 0 : index
    %5 = vector.load %arg3[%c0_8, %c0_9] : memref<8x32xbf16, #tpu.memory_space<vmem>>, vector<8x32xbf16>
    %cst = arith.constant dense<0.000000e+00> : vector<256x32xf32>
    %6 = tpu.matmul %4, %5, %cst {dimension_numbers = #tpu.dot_dimension_numbers<[1], [0], [0], [1], [0, 0, 1, 1], [], []>} : vector<256x8xbf16>, vector<8x32xbf16>, vector<256x32xf32> -> vector<256x32xf32>
    %7 = vector.broadcast %1 : vector<1x32xf32> to vector<256x32xf32>
    %8 = arith.addf %6, %7 : vector<256x32xf32>
    %cst_10 = arith.constant dense<0.000000e+00> : vector<256x32xf32>
    %9 = tpu.matmul %0, %8, %cst_10 {dimension_numbers = #tpu.dot_dimension_numbers<[1], [0], [0], [1], [0, 0, 1, 1], [], []>} : vector<256x256xf32>, vector<256x32xf32>, vector<256x32xf32> -> vector<256x32xf32>
    %10 = arith.truncf %9 : vector<256x32xf32> to vector<256x32xbf16>
    %c0_11 = arith.constant 0 : index
    %c0_12 = arith.constant 0 : index
    %c0_13 = arith.constant 0 : index
    %11 = vector.load %arg5[%c0_11, %c0_12, %c0_13] : memref<2x32x32xbf16, #tpu.memory_space<vmem>>, vector<1x32x32xbf16>
    %12 = vector.shape_cast %11 : vector<1x32x32xbf16> to vector<32x32xbf16>
    %cst_14 = arith.constant dense<0.000000e+00> : vector<256x32xf32>
    %13 = tpu.matmul %10, %12, %cst_14 {dimension_numbers = #tpu.dot_dimension_numbers<[1], [0], [0], [1], [0, 0, 1, 1], [], []>} : vector<256x32xbf16>, vector<32x32xbf16>, vector<256x32xf32> -> vector<256x32xf32>
    %14 = vector.extract_strided_slice %2 {offsets = [0, 0, 0], sizes = [1, 1, 32], strides = [1, 1, 1]} : vector<2x1x32xf32> to vector<1x1x32xf32>
    %15 = vector.shape_cast %14 : vector<1x1x32xf32> to vector<1x32xf32>
    %16 = vector.broadcast %15 : vector<1x32xf32> to vector<256x32xf32>
    %17 = arith.addf %13, %16 : vector<256x32xf32>
    %cst_15 = arith.constant 0.000000e+00 : f32
    %18 = vector.broadcast %cst_15 : f32 to vector<256x32xf32>
    %19 = arith.maximumf %17, %18 : vector<256x32xf32>
    %20 = arith.addf %8, %19 : vector<256x32xf32>
    %cst_16 = arith.constant dense<0.000000e+00> : vector<256x32xf32>
    %21 = tpu.matmul %0, %20, %cst_16 {dimension_numbers = #tpu.dot_dimension_numbers<[1], [0], [0], [1], [0, 0, 1, 1], [], []>} : vector<256x256xf32>, vector<256x32xf32>, vector<256x32xf32> -> vector<256x32xf32>
    %22 = arith.truncf %21 : vector<256x32xf32> to vector<256x32xbf16>
    %c1 = arith.constant 1 : index
    %c0_17 = arith.constant 0 : index
    %c0_18 = arith.constant 0 : index
    %23 = vector.load %arg5[%c1, %c0_17, %c0_18] : memref<2x32x32xbf16, #tpu.memory_space<vmem>>, vector<1x32x32xbf16>
    %24 = vector.shape_cast %23 : vector<1x32x32xbf16> to vector<32x32xbf16>
    %cst_19 = arith.constant dense<0.000000e+00> : vector<256x32xf32>
    %25 = tpu.matmul %22, %24, %cst_19 {dimension_numbers = #tpu.dot_dimension_numbers<[1], [0], [0], [1], [0, 0, 1, 1], [], []>} : vector<256x32xbf16>, vector<32x32xbf16>, vector<256x32xf32> -> vector<256x32xf32>
    %26 = vector.extract_strided_slice %2 {offsets = [1, 0, 0], sizes = [1, 1, 32], strides = [1, 1, 1]} : vector<2x1x32xf32> to vector<1x1x32xf32>
    %27 = vector.shape_cast %26 : vector<1x1x32xf32> to vector<1x32xf32>
    %28 = vector.broadcast %27 : vector<1x32xf32> to vector<256x32xf32>
    %29 = arith.addf %25, %28 : vector<256x32xf32>
    %cst_20 = arith.constant 0.000000e+00 : f32
    %30 = vector.broadcast %cst_20 : f32 to vector<256x32xf32>
    %31 = arith.maximumf %29, %30 : vector<256x32xf32>
    %32 = arith.addf %20, %31 : vector<256x32xf32>
    %33 = arith.truncf %32 : vector<256x32xf32> to vector<256x32xbf16>
    %c0_21 = arith.constant 0 : index
    %c0_22 = arith.constant 0 : index
    %34 = vector.load %arg7[%c0_21, %c0_22] : memref<32x128xbf16, #tpu.memory_space<vmem>>, vector<32x128xbf16>
    %cst_23 = arith.constant dense<0.000000e+00> : vector<256x128xf32>
    %35 = tpu.matmul %33, %34, %cst_23 {dimension_numbers = #tpu.dot_dimension_numbers<[1], [0], [0], [1], [0, 0, 1, 1], [], []>} : vector<256x32xbf16>, vector<32x128xbf16>, vector<256x128xf32> -> vector<256x128xf32>
    %c0_24 = arith.constant 0 : index
    %c0_25 = arith.constant 0 : index
    %36 = vector.load %arg8[%c0_24, %c0_25] : memref<1x128xf32, #tpu.memory_space<vmem>>, vector<1x128xf32>
    %37 = vector.broadcast %36 : vector<1x128xf32> to vector<256x128xf32>
    %38 = arith.addf %35, %37 : vector<256x128xf32>
    %c0_26 = arith.constant 0 : index
    %c0_27 = arith.constant 0 : index
    %39 = vector.load %arg9[%c0_26, %c0_27] : memref<256x128xf32, #tpu.memory_space<vmem>>, vector<256x128xf32>
    tpu.vector_store %arg9[%c0_26, %c0_27], %38 {strides = array<i32>} : memref<256x128xf32, #tpu.memory_space<vmem>>, vector<256x128xf32>,
    return
  }
  func.func @transform_0(%arg0: i32) -> (i32, i32) {
    %c0_i32 = arith.constant 0 : i32
    %c0_i32_0 = arith.constant 0 : i32
    return %arg0, %c0_i32 : i32, i32
  }
  func.func @transform_1(%arg0: i32) -> (i32, i32) {
    %c0_i32 = arith.constant 0 : i32
    %c0_i32_0 = arith.constant 0 : i32
    return %arg0, %c0_i32 : i32, i32
  }
  func.func @transform_2(%arg0: i32) -> (i32, i32) {
    %c0_i32 = arith.constant 0 : i32
    %c0_i32_0 = arith.constant 0 : i32
    %c0_i32_1 = arith.constant 0 : i32
    return %c0_i32, %c0_i32_0 : i32, i32
  }
  func.func @transform_3(%arg0: i32) -> (i32, i32) {
    %c0_i32 = arith.constant 0 : i32
    %c0_i32_0 = arith.constant 0 : i32
    %c0_i32_1 = arith.constant 0 : i32
    return %c0_i32, %c0_i32_0 : i32, i32
  }
  func.func @transform_4(%arg0: i32) -> (i32, i32, i32) {
    %c0_i32 = arith.constant 0 : i32
    %c0_i32_0 = arith.constant 0 : i32
    %c0_i32_1 = arith.constant 0 : i32
    %c0_i32_2 = arith.constant 0 : i32
    return %c0_i32, %c0_i32_0, %c0_i32_1 : i32, i32, i32
  }
  func.func @transform_5(%arg0: i32) -> (i32, i32, i32) {
    %c0_i32 = arith.constant 0 : i32
    %c0_i32_0 = arith.constant 0 : i32
    %c0_i32_1 = arith.constant 0 : i32
    %c0_i32_2 = arith.constant 0 : i32
    return %c0_i32, %c0_i32_0, %c0_i32_1 : i32, i32, i32
  }
  func.func @transform_6(%arg0: i32) -> (i32, i32) {
    %c0_i32 = arith.constant 0 : i32
    %c0_i32_0 = arith.constant 0 : i32
    %c0_i32_1 = arith.constant 0 : i32
    return %c0_i32, %c0_i32_0 : i32, i32
  }
  func.func @transform_7(%arg0: i32) -> (i32, i32) {
    %c0_i32 = arith.constant 0 : i32
    %c0_i32_0 = arith.constant 0 : i32
    %c0_i32_1 = arith.constant 0 : i32
    return %c0_i32, %c0_i32_0 : i32, i32
  }
  func.func @transform_8(%arg0: i32) -> (i32, i32) {
    %c0_i32 = arith.constant 0 : i32
    %c0_i32_0 = arith.constant 0 : i32
    return %arg0, %c0_i32 : i32, i32
  }
}

</mosaic_0001>

<llo_original>
// kernel: tpu_custom_call.1
$region0: #{tpu_custom_call.1}
  #allocation0 [shape = 'u32[]', space=smem, size = 0x4, offset = 0x4, fixed_abs, tag = 'smem constant byte address 0x4 - core index']
  #allocation1 [shape = 'u32[144,128]{1,0:T(1,128)}', space=vmem, size = 0x12000, scoped, tag = 'internal scratch']
  %s0 = inlined_call_operand.hbm [shape: f32[1024,256], index: 0, kind: input, shape index: {}]
  %s1 = inlined_call_operand.vmem [shape: f32[1024,8], index: 1, kind: input, shape index: {}]
  %s2 = inlined_call_operand.vmem [shape: bf16[8,32], index: 2, kind: input, shape index: {}]
  %s3 = inlined_call_operand.vmem [shape: f32[1,32], index: 3, kind: input, shape index: {}]
  %s4 = inlined_call_operand.vmem [shape: bf16[2,32,32], index: 4, kind: input, shape index: {}]
  %s5 = inlined_call_operand.vmem [shape: f32[2,1,32], index: 5, kind: input, shape index: {}]
  %s6 = inlined_call_operand.vmem [shape: bf16[32,128], index: 6, kind: input, shape index: {}]
  %s7 = inlined_call_operand.vmem [shape: f32[1,128], index: 7, kind: input, shape index: {}]
  %s8 = inlined_call_operand.hbm [shape: f32[1024,128], index: 8, kind: output, shape index: {}]
  %s9 = sld [smem:[#allocation0]]
  $region69: #{tpu_custom_call.1} parent=0
    _
  %s11 = ssub.s32 1, %s9
  %s12 = scalar_select 0, %s11, %s9
  $region1: #{tpu_custom_call.1} parent=0
    #allocation2 [shape = 'u8[524288]{0}', space=vmem, size = 0x80000, scoped, tag = 'input window, operand 0']
    #allocation3 [shape = 's32[2]{0}', space=sflag, size = 0x8, scoped, tag = 'scoped memory for tpu_custom_call.1']
    #allocation4 [shape = 's32[2]{0}', space=sflag, size = 0x8, scoped, tag = 'scoped memory for tpu_custom_call.1']
    #allocation5 [shape = 'u8[262144]{0}', space=vmem, size = 0x40000, scoped, tag = 'output window, operand 0']
    %13 = vsyncpa [#allocation3], 0
    %s14 = scalar_lea.sflag [#allocation3], 1
    %15 = vsyncpa %s14, 0
    %16 = vsyncpa [#allocation4], 0
    %s17 = scalar_lea.sflag [#allocation4], 1
    %18 = vsyncpa %s17, 0
    loop: start=0, step=1, limit=6
    $region2: #{tpu_custom_call.1} parent=1 // loop_pre_header
      _
    $region3: #{tpu_custom_call.1} parent=1 // loop_header
      %s20 = sphi 0, %s24
      %p21 = scmp.ge.s32.totalorder %s20, 6
      %s30 = sphi 0, %s32
      %s33 = sphi 0, %s30
      %s34 = sphi 0, %s33
      %s50 = sphi 0, %s34
      %s56 = sphi 0, %s58
      %s59 = sphi 0, %s56
      %s60 = sphi 0, %s59
      %s76 = sphi 0, %s60
      %s80 = sphi 0, %s80
      %s82 = sphi 0, %s80
      %s83 = sphi 0, %s82
      %s97 = sphi 0, %s83
      %s101 = sphi 0, %s101
      %s103 = sphi 0, %s101
      %s104 = sphi 0, %s103
      %s118 = sphi 0, %s104
      %s122 = sphi 0, %s122
      %s124 = sphi 0, %s122
      %s125 = sphi 0, %s124
      %s139 = sphi 0, %s125
      %s143 = sphi 0, %s143
      %s145 = sphi 0, %s143
      %s146 = sphi 0, %s145
      %s160 = sphi 0, %s146
      %s164 = sphi 0, %s164
      %s166 = sphi 0, %s164
      %s167 = sphi 0, %s166
      %s181 = sphi 0, %s167
      %s185 = sphi 0, %s185
      %s187 = sphi 0, %s185
      %s188 = sphi 0, %s187
      %s202 = sphi 0, %s188
      %s208 = sphi 0, %s210
      %s211 = sphi 0, %s208
      %s212 = sphi 0, %s211
      %s228 = sphi 0, %s212
    $region4: #{tpu_custom_call.1} parent=1 // loop_header_branch
      %23 = sbr.rel (%p21) target = $region8
    $region5: #{tpu_custom_call.1} parent=1 // loop_body
      %s25 = ssub.s32 %s20, 1
      %s26 = ssub.s32 %s20, 2
      %s27 = sadd.s32 %s20, 1
      %s28 = ssub.s32 %s20, %s27
      %p29 = scmp.eq.s32.totalorder %s28, 0
      %s31 = sadd.s32 %s30, 1
      %s32 = scalar_select %p29, %s30, %s31
      %p35 = pneg %p29
      %p36 = scmp.eq.s32.totalorder %s20, 3
      %p37 = por %p35, %p36
      %p38 = scmp.ne.s32.totalorder %s30, %s33
      %p39 = scmp.eq.s32.totalorder %s20, 0
      %p40 = por %p38, %p39
      %p41 = scmp.ne.s32.totalorder %s30, %s33
      %p42 = scmp.eq.s32.totalorder %s25, 3
      %p43 = por %p41, %p42
      %p44 = scmp.ne.s32.totalorder %s33, %s34
      %p45 = scmp.eq.s32.totalorder %s25, 0
      %p46 = por %p44, %p45
      %p47 = scmp.ne.s32.totalorder %s33, %s34
      %p48 = scmp.eq.s32.totalorder %s26, 3
      %p49 = por %p47, %p48
      %p51 = scmp.ne.s32.totalorder %s34, %s50
      %p52 = scmp.eq.s32.totalorder %s26, 0
      %p53 = por %p51, %p52
      %s54 = ssub.s32 %s20, %s27
      %p55 = scmp.eq.s32.totalorder %s54, 0
      %s57 = sadd.s32 %s56, 1
      %s58 = scalar_select %p55, %s56, %s57
      %p61 = pneg %p55
      %p62 = scmp.eq.s32.totalorder %s20, 3
      %p63 = por %p61, %p62
      %p64 = scmp.ne.s32.totalorder %s56, %s59
      %p65 = scmp.eq.s32.totalorder %s20, 0
      %p66 = por %p64, %p65
      %p67 = scmp.ne.s32.totalorder %s56, %s59
      %p68 = scmp.eq.s32.totalorder %s25, 3
      %p69 = por %p67, %p68
      %p70 = scmp.ne.s32.totalorder %s59, %s60
      %p71 = scmp.eq.s32.totalorder %s25, 0
      %p72 = por %p70, %p71
      %p73 = scmp.ne.s32.totalorder %s59, %s60
      %p74 = scmp.eq.s32.totalorder %s26, 3
      %p75 = por %p73, %p74
      %p77 = scmp.ne.s32.totalorder %s60, %s76
      %p78 = scmp.eq.s32.totalorder %s26, 0
      %p79 = por %p77, %p78
      %s81 = sadd.s32 %s80, 1
      %p84 = scmp.eq.s32.totalorder %s20, 3
      %p85 = scmp.ne.s32.totalorder %s80, %s82
      %p86 = scmp.eq.s32.totalorder %s20, 0
      %p87 = por %p85, %p86
      %p88 = scmp.ne.s32.totalorder %s80, %s82
      %p89 = scmp.eq.s32.totalorder %s25, 3
      %p90 = por %p88, %p89
      %p91 = scmp.ne.s32.totalorder %s82, %s83
      %p92 = scmp.eq.s32.totalorder %s25, 0
      %p93 = por %p91, %p92
      %p94 = scmp.ne.s32.totalorder %s82, %s83
      %p95 = scmp.eq.s32.totalorder %s26, 3
      %p96 = por %p94, %p95
      %p98 = scmp.ne.s32.totalorder %s83, %s97
      %p99 = scmp.eq.s32.totalorder %s26, 0
      %p100 = por %p98, %p99
      %s102 = sadd.s32 %s101, 1
      %p105 = scmp.eq.s32.totalorder %s20, 3
      %p106 = scmp.ne.s32.totalorder %s101, %s103
      %p107 = scmp.eq.s32.totalorder %s20, 0
      %p108 = por %p106, %p107
      %p109 = scmp.ne.s32.totalorder %s101, %s103
      %p110 = scmp.eq.s32.totalorder %s25, 3
      %p111 = por %p109, %p110
      %p112 = scmp.ne.s32.totalorder %s103, %s104
      %p113 = scmp.eq.s32.totalorder %s25, 0
      %p114 = por %p112, %p113
      %p115 = scmp.ne.s32.totalorder %s103, %s104
      %p116 = scmp.eq.s32.totalorder %s26, 3
      %p117 = por %p115, %p116
      %p119 = scmp.ne.s32.totalorder %s104, %s118
      %p120 = scmp.eq.s32.totalorder %s26, 0
      %p121 = por %p119, %p120
      %s123 = sadd.s32 %s122, 1
      %p126 = scmp.eq.s32.totalorder %s20, 3
      %p127 = scmp.ne.s32.totalorder %s122, %s124
      %p128 = scmp.eq.s32.totalorder %s20, 0
      %p129 = por %p127, %p128
      %p130 = scmp.ne.s32.totalorder %s122, %s124
      %p131 = scmp.eq.s32.totalorder %s25, 3
      %p132 = por %p130, %p131
      %p133 = scmp.ne.s32.totalorder %s124, %s125
      %p134 = scmp.eq.s32.totalorder %s25, 0
      %p135 = por %p133, %p134
      %p136 = scmp.ne.s32.totalorder %s124, %s125
      %p137 = scmp.eq.s32.totalorder %s26, 3
      %p138 = por %p136, %p137
      %p140 = scmp.ne.s32.totalorder %s125, %s139
      %p141 = scmp.eq.s32.totalorder %s26, 0
      %p142 = por %p140, %p141
      %s144 = sadd.s32 %s143, 1
      %p147 = scmp.eq.s32.totalorder %s20, 3
      %p148 = scmp.ne.s32.totalorder %s143, %s145
      %p149 = scmp.eq.s32.totalorder %s20, 0
      %p150 = por %p148, %p149
      %p151 = scmp.ne.s32.totalorder %s143, %s145
      %p152 = scmp.eq.s32.totalorder %s25, 3
      %p153 = por %p151, %p152
      %p154 = scmp.ne.s32.totalorder %s145, %s146
      %p155 = scmp.eq.s32.totalorder %s25, 0
      %p156 = por %p154, %p155
      %p157 = scmp.ne.s32.totalorder %s145, %s146
      %p158 = scmp.eq.s32.totalorder %s26, 3
      %p159 = por %p157, %p158
      %p161 = scmp.ne.s32.totalorder %s146, %s160
      %p162 = scmp.eq.s32.totalorder %s26, 0
      %p163 = por %p161, %p162
      %s165 = sadd.s32 %s164, 1
      %p168 = scmp.eq.s32.totalorder %s20, 3
      %p169 = scmp.ne.s32.totalorder %s164, %s166
      %p170 = scmp.eq.s32.totalorder %s20, 0
      %p171 = por %p169, %p170
      %p172 = scmp.ne.s32.totalorder %s164, %s166
      %p173 = scmp.eq.s32.totalorder %s25, 3
      %p174 = por %p172, %p173
      %p175 = scmp.ne.s32.totalorder %s166, %s167
      %p176 = scmp.eq.s32.totalorder %s25, 0
      %p177 = por %p175, %p176
      %p178 = scmp.ne.s32.totalorder %s166, %s167
      %p179 = scmp.eq.s32.totalorder %s26, 3
      %p180 = por %p178, %p179
      %p182 = scmp.ne.s32.totalorder %s167, %s181
      %p183 = scmp.eq.s32.totalorder %s26, 0
      %p184 = por %p182, %p183
      %s186 = sadd.s32 %s185, 1
      %p189 = scmp.eq.s32.totalorder %s20, 3
      %p190 = scmp.ne.s32.totalorder %s185, %s187
      %p191 = scmp.eq.s32.totalorder %s20, 0
      %p192 = por %p190, %p191
      %p193 = scmp.ne.s32.totalorder %s185, %s187
      %p194 = scmp.eq.s32.totalorder %s25, 3
      %p195 = por %p193, %p194
      %p196 = scmp.ne.s32.totalorder %s187, %s188
      %p197 = scmp.eq.s32.totalorder %s25, 0
      %p198 = por %p196, %p197
      %p199 = scmp.ne.s32.totalorder %s187, %s188
      %p200 = scmp.eq.s32.totalorder %s26, 3
      %p201 = por %p199, %p200
      %p203 = scmp.ne.s32.totalorder %s188, %s202
      %p204 = scmp.eq.s32.totalorder %s26, 0
      %p205 = por %p203, %p204
      %s206 = ssub.s32 %s20, %s27
      %p207 = scmp.eq.s32.totalorder %s206, 0
      %s209 = sadd.s32 %s208, 1
      %s210 = scalar_select %p207, %s208, %s209
      %p213 = pneg %p207
      %p214 = scmp.eq.s32.totalorder %s20, 3
      %p215 = por %p213, %p214
      %p216 = scmp.ne.s32.totalorder %s208, %s211
      %p217 = scmp.eq.s32.totalorder %s20, 0
      %p218 = por %p216, %p217
      %p219 = scmp.ne.s32.totalorder %s208, %s211
      %p220 = scmp.eq.s32.totalorder %s25, 3
      %p221 = por %p219, %p220
      %p222 = scmp.ne.s32.totalorder %s211, %s212
      %p223 = scmp.eq.s32.totalorder %s25, 0
      %p224 = por %p222, %p223
      %p225 = scmp.ne.s32.totalorder %s211, %s212
      %p226 = scmp.eq.s32.totalorder %s26, 3
      %p227 = por %p225, %p226
      %p229 = scmp.ne.s32.totalorder %s212, %s228
      %p230 = scmp.eq.s32.totalorder %s26, 0
      %p231 = por %p229, %p230
      %p232 = scmp.le.s32.totalorder 1, %s20
      %p233 = scmp.lt.s32.totalorder %s20, 5
      %p234 = pnand %p232, %p233
      %p235 = pneg %p234
      // Predicated region
      $region9: #{tpu_custom_call.1} parent=5 // pred_check
        _
      $region10: #{tpu_custom_call.1} parent=5 // pred_check_branch
        %237 = sbr.rel (%p234) target = $region12
      $region11: #{tpu_custom_call.1} parent=5 // pred_region
        %s238 = ssub.s32 %s20, 1
        // Predicated region
        $region13: #{tpu_custom_call.1} parent=11 // pred_check
          %p239 = pneg %p93
        $region14: #{tpu_custom_call.1} parent=11 // pred_check_branch
          %241 = sbr.rel (%p239) target = $region16
        $region15: #{tpu_custom_call.1} parent=11 // pred_region
          _
        $region16: #{tpu_custom_call.1} parent=11 // pred_fallthru
          _
        // Predicated region
        $region17: #{tpu_custom_call.1} parent=11 // pred_check
          %p242 = pneg %p114
        $region18: #{tpu_custom_call.1} parent=11 // pred_check_branch
          %244 = sbr.rel (%p242) target = $region20
        $region19: #{tpu_custom_call.1} parent=11 // pred_region
          _
        $region20: #{tpu_custom_call.1} parent=11 // pred_fallthru
          _
        // Predicated region
        $region21: #{tpu_custom_call.1} parent=11 // pred_check
          %p245 = pneg %p135
        $region22: #{tpu_custom_call.1} parent=11 // pred_check_branch
          %247 = sbr.rel (%p245) target = $region24
        $region23: #{tpu_custom_call.1} parent=11 // pred_region
          _
        $region24: #{tpu_custom_call.1} parent=11 // pred_fallthru
          _
        // Predicated region
        $region25: #{tpu_custom_call.1} parent=11 // pred_check
          %p248 = pneg %p156
        $region26: #{tpu_custom_call.1} parent=11 // pred_check_branch
          %250 = sbr.rel (%p248) target = $region28
        $region27: #{tpu_custom_call.1} parent=11 // pred_region
          _
        $region28: #{tpu_custom_call.1} parent=11 // pred_fallthru
          _
        // Predicated region
        $region29: #{tpu_custom_call.1} parent=11 // pred_check
          %p251 = pneg %p177
        $region30: #{tpu_custom_call.1} parent=11 // pred_check_branch
          %253 = sbr.rel (%p251) target = $region32
        $region31: #{tpu_custom_call.1} parent=11 // pred_region
          _
        $region32: #{tpu_custom_call.1} parent=11 // pred_fallthru
          _
        // Predicated region
        $region33: #{tpu_custom_call.1} parent=11 // pred_check
          %p254 = pneg %p198
        $region34: #{tpu_custom_call.1} parent=11 // pred_check_branch
          %256 = sbr.rel (%p254) target = $region36
        $region35: #{tpu_custom_call.1} parent=11 // pred_region
          _
        $region36: #{tpu_custom_call.1} parent=11 // pred_fallthru
          _
      $region12: #{tpu_custom_call.1} parent=5 // pred_fallthru
        _
      %p257 = scmp.lt.s32.totalorder %s20, 4
      // Predicated region
      $region37: #{tpu_custom_call.1} parent=5 // pred_check
        %p258 = pneg %p257
      $region38: #{tpu_custom_call.1} parent=5 // pred_check_branch
        %260 = sbr.rel (%p258) target = $region40
      $region39: #{tpu_custom_call.1} parent=5 // pred_region
        // Predicated region
        $region41: #{tpu_custom_call.1} parent=39 // pred_check
          %p261 = pneg %p40
        $region42: #{tpu_custom_call.1} parent=39 // pred_check_branch
          %263 = sbr.rel (%p261) target = $region44
        $region43: #{tpu_custom_call.1} parent=39 // pred_region
          %s264 = sand.u32 %s30, 1
          %s265 = scalar_lea.sflag [#allocation3], %s264
          %s266 = sand.u32 %s30, 1
          %s267 = smul.addr %s266, 512
          %s268 = scalar_lea.vmem [#allocation2], %s267
          %s269 = smul.u32 32, %s20
          %s271 = ssub.s32 8192, 8192
          %272 = vsyncadd %s265, %s271
          %s273 = smul.addr %s269, 2
          %s274 = smul.addr %s273, 128
          %s275 = scalar_lea.hbm %s0, %s274
          %s276 = sshll.u32 %s268, 4
          %s277 = int_to_ptr.vmem [resolvable:$true] %s276
          %282 = dma.hbm_to_vmem [thread:$0]  %s275, 8192, %s277, %s265, 256, 256, 16
        $region44: #{tpu_custom_call.1} parent=39 // pred_fallthru
          _
        // Predicated region
        $region45: #{tpu_custom_call.1} parent=39 // pred_check
          %p283 = pneg %p66
        $region46: #{tpu_custom_call.1} parent=39 // pred_check_branch
          %285 = sbr.rel (%p283) target = $region48
        $region47: #{tpu_custom_call.1} parent=39 // pred_region
          %s286 = smul.u32 32, %s20
          %p287 = scmp.lt.s32.totalorder %s286, 127
          %s288 = scalar_select %p287, %s286, 127
          %s289 = smul.addr %s288, 8
          %s290 = scalar_lea.vmem %s1, %s289
          %s291 = smul.u32 32, %s20
        $region48: #{tpu_custom_call.1} parent=39 // pred_fallthru
          _
      $region40: #{tpu_custom_call.1} parent=5 // pred_fallthru
        _
      %p292 = scmp.le.s32.totalorder 1, %s20
      %p293 = scmp.lt.s32.totalorder %s20, 5
      %p294 = pnand %p292, %p293
      %p295 = pneg %p294
      // Predicated region
      $region49: #{tpu_custom_call.1} parent=5 // pred_check
        _
      $region50: #{tpu_custom_call.1} parent=5 // pred_check_branch
        %297 = sbr.rel (%p294) target = $region52
      $region51: #{tpu_custom_call.1} parent=5 // pred_region
        %s298 = ssub.s32 %s20, 1
        %s299 = sand.u32 %s33, 1
        %s300 = scalar_lea.sflag [#allocation3], %s299
        %s301 = sand.u32 %s33, 1
        %s302 = smul.addr %s301, 512
        %s303 = scalar_lea.vmem [#allocation2], %s302
        // Predicated region
        $region53: #{tpu_custom_call.1} parent=51 // pred_check
          %p304 = pneg %p46
        $region54: #{tpu_custom_call.1} parent=51 // pred_check_branch
          %306 = sbr.rel (%p304) target = $region56
        $region55: #{tpu_custom_call.1} parent=51 // pred_region
          %307 = dma.done %s300, 8192
        $region56: #{tpu_custom_call.1} parent=51 // pred_fallthru
          _
        %s308 = sand.u32 %s33, 1
        %s309 = scalar_lea.sflag [#allocation3], %s308
        %s310 = sand.u32 %s33, 1
        %s311 = smul.addr %s310, 512
        %s312 = scalar_lea.vmem [#allocation2], %s311
        %p313 = pneg %p46
        %p314 = pneg %p43
        %s315 = smul.u32 32, %s25
        %p316 = scmp.lt.s32.totalorder %s315, 127
        %s317 = scalar_select %p316, %s315, 127
        %s318 = smul.addr %s317, 8
        %s319 = scalar_lea.vmem %s1, %s318
        %p320 = pneg %p72
        %p321 = pneg %p69
        %p322 = pneg %p93
        %p323 = pneg %p90
        %p324 = pneg %p114
        %p325 = pneg %p111
        %p326 = pneg %p135
        %p327 = pneg %p132
        %p328 = pneg %p156
        %p329 = pneg %p153
        %p330 = pneg %p177
        %p331 = pneg %p174
        %p332 = pneg %p198
        %p333 = pneg %p195
        %p334 = pneg %p224
        %p335 = pneg %p221
        %s336 = sand.u32 %s211, 1
        %s337 = scalar_lea.sflag [#allocation4], %s336
        %s338 = sand.u32 %s211, 1
        %s339 = smul.addr %s338, 256
        %s340 = scalar_lea.vmem [#allocation5], %s339
        %s341 = smul.u32 32, %s25
        %s342 = smul.u32 32, %s25
        %p343 = scmp.lt.s32.totalorder %s342, 127
        %s344 = scalar_select %p343, %s342, 127
        %s345 = smul.addr %s344, 8
        %s346 = scalar_lea.vmem %s1, %s345
        %s347 = smul.u32 32, %s25
        %s348 = smul.u32 32, %s25
        %v350 = vld [vmem:[%s303] sm:$0xff]
        %v351 = vld [vmem:[%s303 + $0x8] sm:$0xff]
        %v352 = vld [vmem:[%s303 + $0x10] sm:$0xff]
        %v353 = vld [vmem:[%s303 + $0x18] sm:$0xff]
        %v354 = vld [vmem:[%s303 + $0x20] sm:$0xff]
        %v355 = vld [vmem:[%s303 + $0x28] sm:$0xff]
        %v356 = vld [vmem:[%s303 + $0x30] sm:$0xff]
        %v357 = vld [vmem:[%s303 + $0x38] sm:$0xff]
        %v358 = vld [vmem:[%s303 + $0x40] sm:$0xff]
        %v359 = vld [vmem:[%s303 + $0x48] sm:$0xff]
        %v360 = vld [vmem:[%s303 + $0x50] sm:$0xff]
        %v361 = vld [vmem:[%s303 + $0x58] sm:$0xff]
        %v362 = vld [vmem:[%s303 + $0x60] sm:$0xff]
        %v363 = vld [vmem:[%s303 + $0x68] sm:$0xff]
        %v364 = vld [vmem:[%s303 + $0x70] sm:$0xff]
        %v365 = vld [vmem:[%s303 + $0x78] sm:$0xff]
        %v366 = vld [vmem:[%s303 + $0x80] sm:$0xff]
        %v367 = vld [vmem:[%s303 + $0x88] sm:$0xff]
        %v368 = vld [vmem:[%s303 + $0x90] sm:$0xff]
        %v369 = vld [vmem:[%s303 + $0x98] sm:$0xff]
        %v370 = vld [vmem:[%s303 + $0xa0] sm:$0xff]
        %v371 = vld [vmem:[%s303 + $0xa8] sm:$0xff]
        %v372 = vld [vmem:[%s303 + $0xb0] sm:$0xff]
        %v373 = vld [vmem:[%s303 + $0xb8] sm:$0xff]
        %v374 = vld [vmem:[%s303 + $0xc0] sm:$0xff]
        %v375 = vld [vmem:[%s303 + $0xc8] sm:$0xff]
        %v376 = vld [vmem:[%s303 + $0xd0] sm:$0xff]
        %v377 = vld [vmem:[%s303 + $0xd8] sm:$0xff]
        %v378 = vld [vmem:[%s303 + $0xe0] sm:$0xff]
        %v379 = vld [vmem:[%s303 + $0xe8] sm:$0xff]
        %v380 = vld [vmem:[%s303 + $0xf0] sm:$0xff]
        %v381 = vld [vmem:[%s303 + $0xf8] sm:$0xff]
        %v382 = vld [vmem:[%s303 + $0x100] sm:$0xff]
        %v383 = vld [vmem:[%s303 + $0x108] sm:$0xff]
        %v384 = vld [vmem:[%s303 + $0x110] sm:$0xff]
        %v385 = vld [vmem:[%s303 + $0x118] sm:$0xff]
        %v386 = vld [vmem:[%s303 + $0x120] sm:$0xff]
        %v387 = vld [vmem:[%s303 + $0x128] sm:$0xff]
        %v388 = vld [vmem:[%s303 + $0x130] sm:$0xff]
        %v389 = vld [vmem:[%s303 + $0x138] sm:$0xff]
        %v390 = vld [vmem:[%s303 + $0x140] sm:$0xff]
        %v391 = vld [vmem:[%s303 + $0x148] sm:$0xff]
        %v392 = vld [vmem:[%s303 + $0x150] sm:$0xff]
        %v393 = vld [vmem:[%s303 + $0x158] sm:$0xff]
        %v394 = vld [vmem:[%s303 + $0x160] sm:$0xff]
        %v395 = vld [vmem:[%s303 + $0x168] sm:$0xff]
        %v396 = vld [vmem:[%s303 + $0x170] sm:$0xff]
        %v397 = vld [vmem:[%s303 + $0x178] sm:$0xff]
        %v398 = vld [vmem:[%s303 + $0x180] sm:$0xff]
        %v399 = vld [vmem:[%s303 + $0x188] sm:$0xff]
        %v400 = vld [vmem:[%s303 + $0x190] sm:$0xff]
        %v401 = vld [vmem:[%s303 + $0x198] sm:$0xff]
        %v402 = vld [vmem:[%s303 + $0x1a0] sm:$0xff]
        %v403 = vld [vmem:[%s303 + $0x1a8] sm:$0xff]
        %v404 = vld [vmem:[%s303 + $0x1b0] sm:$0xff]
        %v405 = vld [vmem:[%s303 + $0x1b8] sm:$0xff]
        %v406 = vld [vmem:[%s303 + $0x1c0] sm:$0xff]
        %v407 = vld [vmem:[%s303 + $0x1c8] sm:$0xff]
        %v408 = vld [vmem:[%s303 + $0x1d0] sm:$0xff]
        %v409 = vld [vmem:[%s303 + $0x1d8] sm:$0xff]
        %v410 = vld [vmem:[%s303 + $0x1e0] sm:$0xff]
        %v411 = vld [vmem:[%s303 + $0x1e8] sm:$0xff]
        %v412 = vld [vmem:[%s303 + $0x1f0] sm:$0xff]
        %v413 = vld [vmem:[%s303 + $0x1f8] sm:$0xff]
        %v414 = vld [vmem:[%s3] sm:$0x1]
        %v415 = vld [vmem:[%s5] sm:$0x1]
        %v416 = vld [vmem:[%s5 + $0x1] sm:$0x1]
        %v417 = vld [vmem:[%s346] sm:$0xff]
        %v418 = vld [vmem:[%s346 + $0x8] sm:$0xff]
        %v419 = vld [vmem:[%s346 + $0x10] sm:$0xff]
        %v420 = vld [vmem:[%s346 + $0x18] sm:$0xff]
        %v421 = vld [vmem:[%s346 + $0x20] sm:$0xff]
        %v422 = vld [vmem:[%s346 + $0x28] sm:$0xff]
        %v423 = vld [vmem:[%s346 + $0x30] sm:$0xff]
        %v424 = vld [vmem:[%s346 + $0x38] sm:$0xff]
        %v425 = vld [vmem:[%s346 + $0x40] sm:$0xff]
        %v426 = vld [vmem:[%s346 + $0x48] sm:$0xff]
        %v427 = vld [vmem:[%s346 + $0x50] sm:$0xff]
        %v428 = vld [vmem:[%s346 + $0x58] sm:$0xff]
        %v429 = vld [vmem:[%s346 + $0x60] sm:$0xff]
        %v430 = vld [vmem:[%s346 + $0x68] sm:$0xff]
        %v431 = vld [vmem:[%s346 + $0x70] sm:$0xff]
        %v432 = vld [vmem:[%s346 + $0x78] sm:$0xff]
        %v433 = vld [vmem:[%s346 + $0x80] sm:$0xff]
        %v434 = vld [vmem:[%s346 + $0x88] sm:$0xff]
        %v435 = vld [vmem:[%s346 + $0x90] sm:$0xff]
        %v436 = vld [vmem:[%s346 + $0x98] sm:$0xff]
        %v437 = vld [vmem:[%s346 + $0xa0] sm:$0xff]
        %v438 = vld [vmem:[%s346 + $0xa8] sm:$0xff]
        %v439 = vld [vmem:[%s346 + $0xb0] sm:$0xff]
        %v440 = vld [vmem:[%s346 + $0xb8] sm:$0xff]
        %v441 = vld [vmem:[%s346 + $0xc0] sm:$0xff]
        %v442 = vld [vmem:[%s346 + $0xc8] sm:$0xff]
        %v443 = vld [vmem:[%s346 + $0xd0] sm:$0xff]
        %v444 = vld [vmem:[%s346 + $0xd8] sm:$0xff]
        %v445 = vld [vmem:[%s346 + $0xe0] sm:$0xff]
        %v446 = vld [vmem:[%s346 + $0xe8] sm:$0xff]
        %v447 = vld [vmem:[%s346 + $0xf0] sm:$0xff]
        %v448 = vld [vmem:[%s346 + $0xf8] sm:$0xff]
        %v449 = vpack.c.bf16 %v418, %v417
        %v450 = vpack.c.bf16 %v420, %v419
        %v451 = vpack.c.bf16 %v422, %v421
        %v452 = vpack.c.bf16 %v424, %v423
        %v453 = vpack.c.bf16 %v426, %v425
        %v454 = vpack.c.bf16 %v428, %v427
        %v455 = vpack.c.bf16 %v430, %v429
        %v456 = vpack.c.bf16 %v432, %v431
        %v457 = vpack.c.bf16 %v434, %v433
        %v458 = vpack.c.bf16 %v436, %v435
        %v459 = vpack.c.bf16 %v438, %v437
        %v460 = vpack.c.bf16 %v440, %v439
        %v461 = vpack.c.bf16 %v442, %v441
        %v462 = vpack.c.bf16 %v444, %v443
        %v463 = vpack.c.bf16 %v446, %v445
        %v464 = vpack.c.bf16 %v448, %v447
        %v465 = vld [vmem:[%s2] sm:$0xf]
        %v467 = vlaneseq
        %v468 = vshrl.u32 %v467, 7
        %v469 = vsub.s32 0, %v468
        %v470 = vrot.slane %v414, %v469
        %vm472 = vcmask 64512
        %v474 = vsel %vm472, %v449, 0
        %v477 = vsel %vm472, %v450, 0
        %v480 = vsel %vm472, %v451, 0
        %v483 = vsel %vm472, %v452, 0
        %v486 = vsel %vm472, %v453, 0
        %v489 = vsel %vm472, %v454, 0
        %v492 = vsel %vm472, %v455, 0
        %v495 = vsel %vm472, %v456, 0
        %v498 = vsel %vm472, %v457, 0
        %v501 = vsel %vm472, %v458, 0
        %v504 = vsel %vm472, %v459, 0
        %v507 = vsel %vm472, %v460, 0
        %v510 = vsel %vm472, %v461, 0
        %v513 = vsel %vm472, %v462, 0
        %v516 = vsel %vm472, %v463, 0
        %v519 = vsel %vm472, %v464, 0
        %vm521 = vcmask 1043456
        %v523 = vsel %vm521, %v465, 0
        %525 = vmatprep.subr.bf16.mxu0 0
        %526 = vmatpush1.bf16.msra.mxu0 0
        %527 = vmatprep.subr.bf16.mxu0 0
        %528 = vmatpush1.bf16.msra.mxu0 0
        %529 = vmatprep.subr.bf16.mxu0 0
        %530 = vmatpush1.bf16.msra.mxu0 0
        %531 = vmatprep.subr.bf16.mxu0 0
        %532 = vmatpush1.bf16.msra.mxu0 0
        %533 = vmatprep.subr.bf16.mxu0 0
        %534 = vmatpush1.bf16.msra.mxu0 0
        %535 = vmatprep.subr.bf16.mxu0 0
        %536 = vmatpush1.bf16.msra.mxu0 0
        %537 = vmatprep.subr.bf16.mxu0 0
        %538 = vmatpush1.bf16.msra.mxu0 0
        %539 = vmatprep.subr.bf16.mxu0 0
        %540 = vmatpush1.bf16.msra.mxu0 %v523
        %541 = vmatprep.subr.bf16.mxu0 0
        %542 = vmatpush2.bf16.msra.mxu0 0
        %543 = vmatprep.subr.bf16.mxu0 0
        %544 = vmatpush2.bf16.msra.mxu0 0
        %545 = vmatprep.subr.bf16.mxu0 0
        %546 = vmatpush2.bf16.msra.mxu0 0
        %547 = vmatprep.subr.bf16.mxu0 0
        %548 = vmatpush2.bf16.msra.mxu0 0
        %549 = vmatprep.subr.bf16.mxu0 0
        %550 = vmatpush2.bf16.msra.mxu0 0
        %551 = vmatprep.subr.bf16.mxu0 0
        %552 = vmatpush2.bf16.msra.mxu0 0
        %553 = vmatprep.subr.bf16.mxu0 0
        %554 = vmatpush2.bf16.msra.mxu0 0
        %555 = vmatprep.subr.bf16.mxu0 0
        %556 = vmatpush2.bf16.msra.mxu0 0
        %557 = vmatprep.mubr.bf16.mxu0 0
        %558 = vmatmul.mubr.bf16.gmra.mxu0 %v474
        %v559 = vpop.f32.mrf.mxu0
        %v560 = vadd.f32 %v470, %v559
        %v561 = vpop.f32.mrf.mxu0
        %v562 = vpop.f32.mrf.mxu0
        %v563 = vadd.f32 %v470, %v562
        %v564 = vpop.f32.mrf.mxu0
        %565 = vmatprep.mubr.bf16.mxu0 0
        %566 = vmatmul.mubr.bf16.gmra.mxu0 %v477
        %v567 = vpop.f32.mrf.mxu0
        %v568 = vadd.f32 %v470, %v567
        %v569 = vpop.f32.mrf.mxu0
        %v570 = vpop.f32.mrf.mxu0
        %v571 = vadd.f32 %v470, %v570
        %v572 = vpop.f32.mrf.mxu0
        %573 = vmatprep.mubr.bf16.mxu0 0
        %574 = vmatmul.mubr.bf16.gmra.mxu0 %v480
        %v575 = vpop.f32.mrf.mxu0
        %v576 = vadd.f32 %v470, %v575
        %v577 = vpop.f32.mrf.mxu0
        %v578 = vpop.f32.mrf.mxu0
        %v579 = vadd.f32 %v470, %v578
        %v580 = vpop.f32.mrf.mxu0
        %581 = vmatprep.mubr.bf16.mxu0 0
        %582 = vmatmul.mubr.bf16.gmra.mxu0 %v483
        %v583 = vpop.f32.mrf.mxu0
        %v584 = vadd.f32 %v470, %v583
        %v585 = vpop.f32.mrf.mxu0
        %v586 = vpop.f32.mrf.mxu0
        %v587 = vadd.f32 %v470, %v586
        %v588 = vpop.f32.mrf.mxu0
        %589 = vmatprep.mubr.bf16.mxu0 0
        %590 = vmatmul.mubr.bf16.gmra.mxu0 %v486
        %v591 = vpop.f32.mrf.mxu0
        %v592 = vadd.f32 %v470, %v591
        %v593 = vpop.f32.mrf.mxu0
        %v594 = vpop.f32.mrf.mxu0
        %v595 = vadd.f32 %v470, %v594
        %v596 = vpop.f32.mrf.mxu0
        %597 = vmatprep.mubr.bf16.mxu0 0
        %598 = vmatmul.mubr.bf16.gmra.mxu0 %v489
        %v599 = vpop.f32.mrf.mxu0
        %v600 = vadd.f32 %v470, %v599
        %v601 = vpop.f32.mrf.mxu0
        %v602 = vpop.f32.mrf.mxu0
        %v603 = vadd.f32 %v470, %v602
        %v604 = vpop.f32.mrf.mxu0
        %605 = vmatprep.mubr.bf16.mxu0 0
        %606 = vmatmul.mubr.bf16.gmra.mxu0 %v492
        %v607 = vpop.f32.mrf.mxu0
        %v608 = vadd.f32 %v470, %v607
        %v609 = vpop.f32.mrf.mxu0
        %v610 = vpop.f32.mrf.mxu0
        %v611 = vadd.f32 %v470, %v610
        %v612 = vpop.f32.mrf.mxu0
        %613 = vmatprep.mubr.bf16.mxu0 0
        %614 = vmatmul.mubr.bf16.gmra.mxu0 %v495
        %v615 = vpop.f32.mrf.mxu0
        %v616 = vadd.f32 %v470, %v615
        %v617 = vpop.f32.mrf.mxu0
        %v618 = vpop.f32.mrf.mxu0
        %v619 = vadd.f32 %v470, %v618
        %v620 = vpop.f32.mrf.mxu0
        %621 = vmatprep.mubr.bf16.mxu0 0
        %622 = vmatmul.mubr.bf16.gmra.mxu0 %v498
        %v623 = vpop.f32.mrf.mxu0
        %v624 = vadd.f32 %v470, %v623
        %v625 = vpop.f32.mrf.mxu0
        %v626 = vpop.f32.mrf.mxu0
        %v627 = vadd.f32 %v470, %v626
        %v628 = vpop.f32.mrf.mxu0
        %629 = vmatprep.mubr.bf16.mxu0 0
        %630 = vmatmul.mubr.bf16.gmra.mxu0 %v501
        %v631 = vpop.f32.mrf.mxu0
        %v632 = vadd.f32 %v470, %v631
        %v633 = vpop.f32.mrf.mxu0
        %v634 = vpop.f32.mrf.mxu0
        %v635 = vadd.f32 %v470, %v634
        %v636 = vpop.f32.mrf.mxu0
        %637 = vmatprep.mubr.bf16.mxu0 0
        %638 = vmatmul.mubr.bf16.gmra.mxu0 %v504
        %v639 = vpop.f32.mrf.mxu0
        %v640 = vadd.f32 %v470, %v639
        %v641 = vpop.f32.mrf.mxu0
        %v642 = vpop.f32.mrf.mxu0
        %v643 = vadd.f32 %v470, %v642
        %v644 = vpop.f32.mrf.mxu0
        %645 = vmatprep.mubr.bf16.mxu0 0
        %646 = vmatmul.mubr.bf16.gmra.mxu0 %v507
        %v647 = vpop.f32.mrf.mxu0
        %v648 = vadd.f32 %v470, %v647
        %v649 = vpop.f32.mrf.mxu0
        %v650 = vpop.f32.mrf.mxu0
        %v651 = vadd.f32 %v470, %v650
        %v652 = vpop.f32.mrf.mxu0
        %653 = vmatprep.mubr.bf16.mxu0 0
        %654 = vmatmul.mubr.bf16.gmra.mxu0 %v510
        %v655 = vpop.f32.mrf.mxu0
        %v656 = vadd.f32 %v470, %v655
        %v657 = vpop.f32.mrf.mxu0
        %v658 = vpop.f32.mrf.mxu0
        %v659 = vadd.f32 %v470, %v658
        %v660 = vpop.f32.mrf.mxu0
        %661 = vmatprep.mubr.bf16.mxu0 0
        %662 = vmatmul.mubr.bf16.gmra.mxu0 %v513
        %v663 = vpop.f32.mrf.mxu0
        %v664 = vadd.f32 %v470, %v663
        %v665 = vpop.f32.mrf.mxu0
        %v666 = vpop.f32.mrf.mxu0
        %v667 = vadd.f32 %v470, %v666
        %v668 = vpop.f32.mrf.mxu0
        %669 = vmatprep.mubr.bf16.mxu0 0
        %670 = vmatmul.mubr.bf16.gmra.mxu0 %v516
        %v671 = vpop.f32.mrf.mxu0
        %v672 = vadd.f32 %v470, %v671
        %v673 = vpop.f32.mrf.mxu0
        %v674 = vpop.f32.mrf.mxu0
        %v675 = vadd.f32 %v470, %v674
        %v676 = vpop.f32.mrf.mxu0
        %677 = vmatprep.mubr.bf16.mxu0 0
        %678 = vmatmul.mubr.bf16.gmra.mxu0 %v519
        %v679 = vpop.f32.mrf.mxu0
        %v680 = vadd.f32 %v470, %v679
        %v681 = vpop.f32.mrf.mxu0
        %v682 = vpop.f32.mrf.mxu0
        %v683 = vadd.f32 %v470, %v682
        %v684 = vpop.f32.mrf.mxu0
        %685 = vdwg.mxu0
        %686 = vmatprep.subr.mxu0 0.0
        %687 = vmatpush1.msra.mxu0 %v619
        %688 = vmatprep.subr.mxu0 0.0
        %689 = vmatpush1.msra.mxu0 %v616
        %690 = vmatprep.subr.mxu0 0.0
        %691 = vmatpush1.msra.mxu0 %v611
        %692 = vmatprep.subr.mxu0 0.0
        %693 = vmatpush1.msra.mxu0 %v608
        %694 = vmatprep.subr.mxu0 0.0
        %695 = vmatpush1.msra.mxu0 %v603
        %696 = vmatprep.subr.mxu0 0.0
        %697 = vmatpush1.msra.mxu0 %v600
        %698 = vmatprep.subr.mxu0 0.0
        %699 = vmatpush1.msra.mxu0 %v595
        %700 = vmatprep.subr.mxu0 0.0
        %701 = vmatpush1.msra.mxu0 %v592
        %702 = vmatprep.subr.mxu0 0.0
        %703 = vmatpush1.msra.mxu0 %v587
        %704 = vmatprep.subr.mxu0 0.0
        %705 = vmatpush1.msra.mxu0 %v584
        %706 = vmatprep.subr.mxu0 0.0
        %707 = vmatpush1.msra.mxu0 %v579
        %708 = vmatprep.subr.mxu0 0.0
        %709 = vmatpush1.msra.mxu0 %v576
        %710 = vmatprep.subr.mxu0 0.0
        %711 = vmatpush1.msra.mxu0 %v571
        %712 = vmatprep.subr.mxu0 0.0
        %713 = vmatpush1.msra.mxu0 %v568
        %714 = vmatprep.subr.mxu0 0.0
        %715 = vmatpush1.msra.mxu0 %v563
        %716 = vmatprep.subr.mxu0 0.0
        %717 = vmatpush1.msra.mxu0 %v560
        %718 = vmatprep.subr.mxu0 0.0
        %719 = vmatpush2.msra.mxu0 %v683
        %720 = vmatprep.subr.mxu0 0.0
        %721 = vmatpush2.msra.mxu0 %v680
        %722 = vmatprep.subr.mxu0 0.0
        %723 = vmatpush2.msra.mxu0 %v675
        %724 = vmatprep.subr.mxu0 0.0
        %725 = vmatpush2.msra.mxu0 %v672
        %726 = vmatprep.subr.mxu0 0.0
        %727 = vmatpush2.msra.mxu0 %v667
        %728 = vmatprep.subr.mxu0 0.0
        %729 = vmatpush2.msra.mxu0 %v664
        %730 = vmatprep.subr.mxu0 0.0
        %731 = vmatpush2.msra.mxu0 %v659
        %732 = vmatprep.subr.mxu0 0.0
        %733 = vmatpush2.msra.mxu0 %v656
        %734 = vmatprep.subr.mxu0 0.0
        %735 = vmatpush2.msra.mxu0 %v651
        %736 = vmatprep.subr.mxu0 0.0
        %737 = vmatpush2.msra.mxu0 %v648
        %738 = vmatprep.subr.mxu0 0.0
        %739 = vmatpush2.msra.mxu0 %v643
        %740 = vmatprep.subr.mxu0 0.0
        %741 = vmatpush2.msra.mxu0 %v640
        %742 = vmatprep.subr.mxu0 0.0
        %743 = vmatpush2.msra.mxu0 %v635
        %744 = vmatprep.subr.mxu0 0.0
        %745 = vmatpush2.msra.mxu0 %v632
        %746 = vmatprep.subr.mxu0 0.0
        %747 = vmatpush2.msra.mxu0 %v627
        %748 = vmatprep.subr.mxu0 0.0
        %749 = vmatpush2.msra.mxu0 %v624
        %750 = vmatprep.mubr.f32.mxu0 %v351
        %751 = vmatmul.mubr.f32.gmra.mxu0 %v350
        %v752 = vpop.f32.mrf.mxu0
        %v753 = vadd.f32 0.0, %v752
        %v754 = vpop.f32.mrf.mxu0
        %755 = vmatprep.mubr.f32.mxu0 %v353
        %756 = vmatmul.mubr.f32.gmra.mxu0 %v352
        %v757 = vpop.f32.mrf.mxu0
        %v758 = vadd.f32 0.0, %v757
        %v759 = vpop.f32.mrf.mxu0
        %760 = vmatprep.mubr.f32.mxu0 %v355
        %761 = vmatmul.mubr.f32.gmra.mxu0 %v354
        %v762 = vpop.f32.mrf.mxu0
        %v763 = vadd.f32 0.0, %v762
        %v764 = vpop.f32.mrf.mxu0
        %765 = vmatprep.mubr.f32.mxu0 %v357
        %766 = vmatmul.mubr.f32.gmra.mxu0 %v356
        %v767 = vpop.f32.mrf.mxu0
        %v768 = vadd.f32 0.0, %v767
        %v769 = vpop.f32.mrf.mxu0
        %770 = vmatprep.mubr.f32.mxu0 %v359
        %771 = vmatmul.mubr.f32.gmra.mxu0 %v358
        %v772 = vpop.f32.mrf.mxu0
        %v773 = vadd.f32 0.0, %v772
        %v774 = vpop.f32.mrf.mxu0
        %775 = vmatprep.mubr.f32.mxu0 %v361
        %776 = vmatmul.mubr.f32.gmra.mxu0 %v360
        %v777 = vpop.f32.mrf.mxu0
        %v778 = vadd.f32 0.0, %v777
        %v779 = vpop.f32.mrf.mxu0
        %780 = vmatprep.mubr.f32.mxu0 %v363
        %781 = vmatmul.mubr.f32.gmra.mxu0 %v362
        %v782 = vpop.f32.mrf.mxu0
        %v783 = vadd.f32 0.0, %v782
        %v784 = vpop.f32.mrf.mxu0
        %785 = vmatprep.mubr.f32.mxu0 %v365
        %786 = vmatmul.mubr.f32.gmra.mxu0 %v364
        %v787 = vpop.f32.mrf.mxu0
        %v788 = vadd.f32 0.0, %v787
        %v789 = vpop.f32.mrf.mxu0
        %790 = vmatprep.mubr.f32.mxu0 %v367
        %791 = vmatmul.mubr.f32.gmra.mxu0 %v366
        %v792 = vpop.f32.mrf.mxu0
        %v793 = vadd.f32 0.0, %v792
        %v794 = vpop.f32.mrf.mxu0
        %795 = vmatprep.mubr.f32.mxu0 %v369
        %796 = vmatmul.mubr.f32.gmra.mxu0 %v368
        %v797 = vpop.f32.mrf.mxu0
        %v798 = vadd.f32 0.0, %v797
        %v799 = vpop.f32.mrf.mxu0
        %800 = vmatprep.mubr.f32.mxu0 %v371
        %801 = vmatmul.mubr.f32.gmra.mxu0 %v370
        %v802 = vpop.f32.mrf.mxu0
        %v803 = vadd.f32 0.0, %v802
        %v804 = vpop.f32.mrf.mxu0
        %805 = vmatprep.mubr.f32.mxu0 %v373
        %806 = vmatmul.mubr.f32.gmra.mxu0 %v372
        %v807 = vpop.f32.mrf.mxu0
        %v808 = vadd.f32 0.0, %v807
        %v809 = vpop.f32.mrf.mxu0
        %810 = vmatprep.mubr.f32.mxu0 %v375
        %811 = vmatmul.mubr.f32.gmra.mxu0 %v374
        %v812 = vpop.f32.mrf.mxu0
        %v813 = vadd.f32 0.0, %v812
        %v814 = vpop.f32.mrf.mxu0
        %815 = vmatprep.mubr.f32.mxu0 %v377
        %816 = vmatmul.mubr.f32.gmra.mxu0 %v376
        %v817 = vpop.f32.mrf.mxu0
        %v818 = vadd.f32 0.0, %v817
        %v819 = vpop.f32.mrf.mxu0
        %820 = vmatprep.mubr.f32.mxu0 %v379
        %821 = vmatmul.mubr.f32.gmra.mxu0 %v378
        %v822 = vpop.f32.mrf.mxu0
        %v823 = vadd.f32 0.0, %v822
        %v824 = vpop.f32.mrf.mxu0
        %825 = vmatprep.mubr.f32.mxu0 %v381
        %826 = vmatmul.mubr.f32.gmra.mxu0 %v380
        %v827 = vpop.f32.mrf.mxu0
        %v828 = vadd.f32 0.0, %v827
        %v829 = vpop.f32.mrf.mxu0
        %830 = vmatprep.mubr.f32.mxu0 %v383
        %831 = vmatmul.mubr.f32.gmra.mxu0 %v382
        %v832 = vpop.f32.mrf.mxu0
        %v833 = vadd.f32 0.0, %v832
        %v834 = vpop.f32.mrf.mxu0
        %835 = vmatprep.mubr.f32.mxu0 %v385
        %836 = vmatmul.mubr.f32.gmra.mxu0 %v384
        %v837 = vpop.f32.mrf.mxu0
        %v838 = vadd.f32 0.0, %v837
        %v839 = vpop.f32.mrf.mxu0
        %840 = vmatprep.mubr.f32.mxu0 %v387
        %841 = vmatmul.mubr.f32.gmra.mxu0 %v386
        %v842 = vpop.f32.mrf.mxu0
        %v843 = vadd.f32 0.0, %v842
        %v844 = vpop.f32.mrf.mxu0
        %845 = vmatprep.mubr.f32.mxu0 %v389
        %846 = vmatmul.mubr.f32.gmra.mxu0 %v388
        %v847 = vpop.f32.mrf.mxu0
        %v848 = vadd.f32 0.0, %v847
        %v849 = vpop.f32.mrf.mxu0
        %850 = vmatprep.mubr.f32.mxu0 %v391
        %851 = vmatmul.mubr.f32.gmra.mxu0 %v390
        %v852 = vpop.f32.mrf.mxu0
        %v853 = vadd.f32 0.0, %v852
        %v854 = vpop.f32.mrf.mxu0
        %855 = vmatprep.mubr.f32.mxu0 %v393
        %856 = vmatmul.mubr.f32.gmra.mxu0 %v392
        %v857 = vpop.f32.mrf.mxu0
        %v858 = vadd.f32 0.0, %v857
        %v859 = vpop.f32.mrf.mxu0
        %860 = vmatprep.mubr.f32.mxu0 %v395
        %861 = vmatmul.mubr.f32.gmra.mxu0 %v394
        %v862 = vpop.f32.mrf.mxu0
        %v863 = vadd.f32 0.0, %v862
        %v864 = vpop.f32.mrf.mxu0
        %865 = vmatprep.mubr.f32.mxu0 %v397
        %866 = vmatmul.mubr.f32.gmra.mxu0 %v396
        %v867 = vpop.f32.mrf.mxu0
        %v868 = vadd.f32 0.0, %v867
        %v869 = vpop.f32.mrf.mxu0
        %870 = vmatprep.mubr.f32.mxu0 %v399
        %871 = vmatmul.mubr.f32.gmra.mxu0 %v398
        %v872 = vpop.f32.mrf.mxu0
        %v873 = vadd.f32 0.0, %v872
        %v874 = vpop.f32.mrf.mxu0
        %875 = vmatprep.mubr.f32.mxu0 %v401
        %876 = vmatmul.mubr.f32.gmra.mxu0 %v400
        %v877 = vpop.f32.mrf.mxu0
        %v878 = vadd.f32 0.0, %v877
        %v879 = vpop.f32.mrf.mxu0
        %880 = vmatprep.mubr.f32.mxu0 %v403
        %881 = vmatmul.mubr.f32.gmra.mxu0 %v402
        %v882 = vpop.f32.mrf.mxu0
        %v883 = vadd.f32 0.0, %v882
        %v884 = vpop.f32.mrf.mxu0
        %885 = vmatprep.mubr.f32.mxu0 %v405
        %886 = vmatmul.mubr.f32.gmra.mxu0 %v404
        %v887 = vpop.f32.mrf.mxu0
        %v888 = vadd.f32 0.0, %v887
        %v889 = vpop.f32.mrf.mxu0
        %890 = vmatprep.mubr.f32.mxu0 %v407
        %891 = vmatmul.mubr.f32.gmra.mxu0 %v406
        %v892 = vpop.f32.mrf.mxu0
        %v893 = vadd.f32 0.0, %v892
        %v894 = vpop.f32.mrf.mxu0
        %895 = vmatprep.mubr.f32.mxu0 %v409
        %896 = vmatmul.mubr.f32.gmra.mxu0 %v408
        %v897 = vpop.f32.mrf.mxu0
        %v898 = vadd.f32 0.0, %v897
        %v899 = vpop.f32.mrf.mxu0
        %900 = vmatprep.mubr.f32.mxu0 %v411
        %901 = vmatmul.mubr.f32.gmra.mxu0 %v410
        %v902 = vpop.f32.mrf.mxu0
        %v903 = vadd.f32 0.0, %v902
        %v904 = vpop.f32.mrf.mxu0
        %905 = vmatprep.mubr.f32.mxu0 %v413
        %906 = vmatmul.mubr.f32.gmra.mxu0 %v412
        %v907 = vpop.f32.mrf.mxu0
        %v908 = vadd.f32 0.0, %v907
        %v909 = vpop.f32.mrf.mxu0
        %910 = vdwg.mxu0
        %v911 = vpack.c.bf16 %v758, %v753
        %v912 = vpack.c.bf16 %v768, %v763
        %v913 = vpack.c.bf16 %v778, %v773
        %v914 = vpack.c.bf16 %v788, %v783
        %v915 = vpack.c.bf16 %v798, %v793
        %v916 = vpack.c.bf16 %v808, %v803
        %v917 = vpack.c.bf16 %v818, %v813
        %v918 = vpack.c.bf16 %v828, %v823
        %v919 = vpack.c.bf16 %v838, %v833
        %v920 = vpack.c.bf16 %v848, %v843
        %v921 = vpack.c.bf16 %v858, %v853
        %v922 = vpack.c.bf16 %v868, %v863
        %v923 = vpack.c.bf16 %v878, %v873
        %v924 = vpack.c.bf16 %v888, %v883
        %v925 = vpack.c.bf16 %v898, %v893
        %v926 = vpack.c.bf16 %v908, %v903
        %v927 = vld [vmem:[%s4] sm:$0xf]
        %v928 = vld [vmem:[%s4 + $0x4] sm:$0xf]
        %v929 = vld [vmem:[%s4 + $0x8] sm:$0xf]
        %v930 = vld [vmem:[%s4 + $0xc] sm:$0xf]
        %v932 = vlaneseq
        %v933 = vshrl.u32 %v932, 7
        %v934 = vsub.s32 0, %v933
        %v935 = vrot.slane %v415, %v934
        %v941 = vunpack.c.l.b16 %v927
        %v942 = vunpack.c.l.b16 %v928
        %v943 = vunpack.c.l.b16 %v929
        %v944 = vunpack.c.l.b16 %v930
        %v945 = vpack.c.b16 %v942, %v941
        %v946 = vpack.c.b16 %v944, %v943
        %vm949 = vcmask 261120
        %v951 = vsel %vm949, %v911, 0
        %v954 = vsel %vm949, %v912, 0
        %v957 = vsel %vm949, %v913, 0
        %v960 = vsel %vm949, %v914, 0
        %v963 = vsel %vm949, %v915, 0
        %v966 = vsel %vm949, %v916, 0
        %v969 = vsel %vm949, %v917, 0
        %v972 = vsel %vm949, %v918, 0
        %v975 = vsel %vm949, %v919, 0
        %v978 = vsel %vm949, %v920, 0
        %v981 = vsel %vm949, %v921, 0
        %v984 = vsel %vm949, %v922, 0
        %v987 = vsel %vm949, %v923, 0
        %v990 = vsel %vm949, %v924, 0
        %v993 = vsel %vm949, %v925, 0
        %v996 = vsel %vm949, %v926, 0
        %998 = vmatprep.subr.bf16.mxu0 0
        %999 = vmatpush1.bf16.msra.mxu0 0
        %1000 = vmatprep.subr.bf16.mxu0 0
        %1001 = vmatpush1.bf16.msra.mxu0 0
        %1002 = vmatprep.subr.bf16.mxu0 0
        %1003 = vmatpush1.bf16.msra.mxu0 0
        %1004 = vmatprep.subr.bf16.mxu0 0
        %1005 = vmatpush1.bf16.msra.mxu0 0
        %1006 = vmatprep.subr.bf16.mxu0 0
        %1007 = vmatpush1.bf16.msra.mxu0 0
        %1008 = vmatprep.subr.bf16.mxu0 0
        %1009 = vmatpush1.bf16.msra.mxu0 0
        %1010 = vmatprep.subr.bf16.mxu0 0
        %1011 = vmatpush1.bf16.msra.mxu0 %v946
        %1012 = vmatprep.subr.bf16.mxu0 0
        %1013 = vmatpush1.bf16.msra.mxu0 %v945
        %1014 = vmatprep.subr.bf16.mxu0 0
        %1015 = vmatpush2.bf16.msra.mxu0 0
        %1016 = vmatprep.subr.bf16.mxu0 0
        %1017 = vmatpush2.bf16.msra.mxu0 0
        %1018 = vmatprep.subr.bf16.mxu0 0
        %1019 = vmatpush2.bf16.msra.mxu0 0
        %1020 = vmatprep.subr.bf16.mxu0 0
        %1021 = vmatpush2.bf16.msra.mxu0 0
        %1022 = vmatprep.subr.bf16.mxu0 0
        %1023 = vmatpush2.bf16.msra.mxu0 0
        %1024 = vmatprep.subr.bf16.mxu0 0
        %1025 = vmatpush2.bf16.msra.mxu0 0
        %1026 = vmatprep.subr.bf16.mxu0 0
        %1027 = vmatpush2.bf16.msra.mxu0 0
        %1028 = vmatprep.subr.bf16.mxu0 0
        %1029 = vmatpush2.bf16.msra.mxu0 0
        %1030 = vmatprep.mubr.bf16.mxu0 0
        %1031 = vmatmul.mubr.bf16.gmra.mxu0 %v951
        %v1032 = vpop.f32.mrf.mxu0
        %v1033 = vadd.f32 %v935, %v1032
        %v1034 = vpop.f32.mrf.mxu0
        %v1035 = vpop.f32.mrf.mxu0
        %v1036 = vadd.f32 %v935, %v1035
        %v1037 = vpop.f32.mrf.mxu0
        %1038 = vmatprep.mubr.bf16.mxu0 0
        %1039 = vmatmul.mubr.bf16.gmra.mxu0 %v954
        %v1040 = vpop.f32.mrf.mxu0
        %v1041 = vadd.f32 %v935, %v1040
        %v1042 = vpop.f32.mrf.mxu0
        %v1043 = vpop.f32.mrf.mxu0
        %v1044 = vadd.f32 %v935, %v1043
        %v1045 = vpop.f32.mrf.mxu0
        %1046 = vmatprep.mubr.bf16.mxu0 0
        %1047 = vmatmul.mubr.bf16.gmra.mxu0 %v957
        %v1048 = vpop.f32.mrf.mxu0
        %v1049 = vadd.f32 %v935, %v1048
        %v1050 = vpop.f32.mrf.mxu0
        %v1051 = vpop.f32.mrf.mxu0
        %v1052 = vadd.f32 %v935, %v1051
        %v1053 = vpop.f32.mrf.mxu0
        %1054 = vmatprep.mubr.bf16.mxu0 0
        %1055 = vmatmul.mubr.bf16.gmra.mxu0 %v960
        %v1056 = vpop.f32.mrf.mxu0
        %v1057 = vadd.f32 %v935, %v1056
        %v1058 = vpop.f32.mrf.mxu0
        %v1059 = vpop.f32.mrf.mxu0
        %v1060 = vadd.f32 %v935, %v1059
        %v1061 = vpop.f32.mrf.mxu0
        %1062 = vmatprep.mubr.bf16.mxu0 0
        %1063 = vmatmul.mubr.bf16.gmra.mxu0 %v963
        %v1064 = vpop.f32.mrf.mxu0
        %v1065 = vadd.f32 %v935, %v1064
        %v1066 = vpop.f32.mrf.mxu0
        %v1067 = vpop.f32.mrf.mxu0
        %v1068 = vadd.f32 %v935, %v1067
        %v1069 = vpop.f32.mrf.mxu0
        %1070 = vmatprep.mubr.bf16.mxu0 0
        %1071 = vmatmul.mubr.bf16.gmra.mxu0 %v966
        %v1072 = vpop.f32.mrf.mxu0
        %v1073 = vadd.f32 %v935, %v1072
        %v1074 = vpop.f32.mrf.mxu0
        %v1075 = vpop.f32.mrf.mxu0
        %v1076 = vadd.f32 %v935, %v1075
        %v1077 = vpop.f32.mrf.mxu0
        %1078 = vmatprep.mubr.bf16.mxu0 0
        %1079 = vmatmul.mubr.bf16.gmra.mxu0 %v969
        %v1080 = vpop.f32.mrf.mxu0
        %v1081 = vadd.f32 %v935, %v1080
        %v1082 = vpop.f32.mrf.mxu0
        %v1083 = vpop.f32.mrf.mxu0
        %v1084 = vadd.f32 %v935, %v1083
        %v1085 = vpop.f32.mrf.mxu0
        %1086 = vmatprep.mubr.bf16.mxu0 0
        %1087 = vmatmul.mubr.bf16.gmra.mxu0 %v972
        %v1088 = vpop.f32.mrf.mxu0
        %v1089 = vadd.f32 %v935, %v1088
        %v1090 = vpop.f32.mrf.mxu0
        %v1091 = vpop.f32.mrf.mxu0
        %v1092 = vadd.f32 %v935, %v1091
        %v1093 = vpop.f32.mrf.mxu0
        %1094 = vmatprep.mubr.bf16.mxu0 0
        %1095 = vmatmul.mubr.bf16.gmra.mxu0 %v975
        %v1096 = vpop.f32.mrf.mxu0
        %v1097 = vadd.f32 %v935, %v1096
        %v1098 = vpop.f32.mrf.mxu0
        %v1099 = vpop.f32.mrf.mxu0
        %v1100 = vadd.f32 %v935, %v1099
        %v1101 = vpop.f32.mrf.mxu0
        %1102 = vmatprep.mubr.bf16.mxu0 0
        %1103 = vmatmul.mubr.bf16.gmra.mxu0 %v978
        %v1104 = vpop.f32.mrf.mxu0
        %v1105 = vadd.f32 %v935, %v1104
        %v1106 = vpop.f32.mrf.mxu0
        %v1107 = vpop.f32.mrf.mxu0
        %v1108 = vadd.f32 %v935, %v1107
        %v1109 = vpop.f32.mrf.mxu0
        %1110 = vmatprep.mubr.bf16.mxu0 0
        %1111 = vmatmul.mubr.bf16.gmra.mxu0 %v981
        %v1112 = vpop.f32.mrf.mxu0
        %v1113 = vadd.f32 %v935, %v1112
        %v1114 = vpop.f32.mrf.mxu0
        %v1115 = vpop.f32.mrf.mxu0
        %v1116 = vadd.f32 %v935, %v1115
        %v1117 = vpop.f32.mrf.mxu0
        %1118 = vmatprep.mubr.bf16.mxu0 0
        %1119 = vmatmul.mubr.bf16.gmra.mxu0 %v984
        %v1120 = vpop.f32.mrf.mxu0
        %v1121 = vadd.f32 %v935, %v1120
        %v1122 = vpop.f32.mrf.mxu0
        %v1123 = vpop.f32.mrf.mxu0
        %v1124 = vadd.f32 %v935, %v1123
        %v1125 = vpop.f32.mrf.mxu0
        %1126 = vmatprep.mubr.bf16.mxu0 0
        %1127 = vmatmul.mubr.bf16.gmra.mxu0 %v987
        %v1128 = vpop.f32.mrf.mxu0
        %v1129 = vadd.f32 %v935, %v1128
        %v1130 = vpop.f32.mrf.mxu0
        %v1131 = vpop.f32.mrf.mxu0
        %v1132 = vadd.f32 %v935, %v1131
        %v1133 = vpop.f32.mrf.mxu0
        %1134 = vmatprep.mubr.bf16.mxu0 0
        %1135 = vmatmul.mubr.bf16.gmra.mxu0 %v990
        %v1136 = vpop.f32.mrf.mxu0
        %v1137 = vadd.f32 %v935, %v1136
        %v1138 = vpop.f32.mrf.mxu0
        %v1139 = vpop.f32.mrf.mxu0
        %v1140 = vadd.f32 %v935, %v1139
        %v1141 = vpop.f32.mrf.mxu0
        %1142 = vmatprep.mubr.bf16.mxu0 0
        %1143 = vmatmul.mubr.bf16.gmra.mxu0 %v993
        %v1144 = vpop.f32.mrf.mxu0
        %v1145 = vadd.f32 %v935, %v1144
        %v1146 = vpop.f32.mrf.mxu0
        %v1147 = vpop.f32.mrf.mxu0
        %v1148 = vadd.f32 %v935, %v1147
        %v1149 = vpop.f32.mrf.mxu0
        %1150 = vmatprep.mubr.bf16.mxu0 0
        %1151 = vmatmul.mubr.bf16.gmra.mxu0 %v996
        %v1152 = vpop.f32.mrf.mxu0
        %v1153 = vadd.f32 %v935, %v1152
        %v1154 = vpop.f32.mrf.mxu0
        %v1155 = vpop.f32.mrf.mxu0
        %v1156 = vadd.f32 %v935, %v1155
        %v1157 = vpop.f32.mrf.mxu0
        %1158 = vdwg.mxu0
        %v1159 = vmax.f32 %v1033, 0.0
        %v1160 = vmax.f32 %v1036, 0.0
        %v1161 = vmax.f32 %v1041, 0.0
        %v1162 = vmax.f32 %v1044, 0.0
        %v1163 = vmax.f32 %v1049, 0.0
        %v1164 = vmax.f32 %v1052, 0.0
        %v1165 = vmax.f32 %v1057, 0.0
        %v1166 = vmax.f32 %v1060, 0.0
        %v1167 = vmax.f32 %v1065, 0.0
        %v1168 = vmax.f32 %v1068, 0.0
        %v1169 = vmax.f32 %v1073, 0.0
        %v1170 = vmax.f32 %v1076, 0.0
        %v1171 = vmax.f32 %v1081, 0.0
        %v1172 = vmax.f32 %v1084, 0.0
        %v1173 = vmax.f32 %v1089, 0.0
        %v1174 = vmax.f32 %v1092, 0.0
        %v1175 = vmax.f32 %v1097, 0.0
        %v1176 = vmax.f32 %v1100, 0.0
        %v1177 = vmax.f32 %v1105, 0.0
        %v1178 = vmax.f32 %v1108, 0.0
        %v1179 = vmax.f32 %v1113, 0.0
        %v1180 = vmax.f32 %v1116, 0.0
        %v1181 = vmax.f32 %v1121, 0.0
        %v1182 = vmax.f32 %v1124, 0.0
        %v1183 = vmax.f32 %v1129, 0.0
        %v1184 = vmax.f32 %v1132, 0.0
        %v1185 = vmax.f32 %v1137, 0.0
        %v1186 = vmax.f32 %v1140, 0.0
        %v1187 = vmax.f32 %v1145, 0.0
        %v1188 = vmax.f32 %v1148, 0.0
        %v1189 = vmax.f32 %v1153, 0.0
        %v1190 = vmax.f32 %v1156, 0.0
        %v1191 = vadd.f32 %v560, %v1159
        %v1192 = vadd.f32 %v563, %v1160
        %v1193 = vadd.f32 %v568, %v1161
        %v1194 = vadd.f32 %v571, %v1162
        %v1195 = vadd.f32 %v576, %v1163
        %v1196 = vadd.f32 %v579, %v1164
        %v1197 = vadd.f32 %v584, %v1165
        %v1198 = vadd.f32 %v587, %v1166
        %v1199 = vadd.f32 %v592, %v1167
        %v1200 = vadd.f32 %v595, %v1168
        %v1201 = vadd.f32 %v600, %v1169
        %v1202 = vadd.f32 %v603, %v1170
        %v1203 = vadd.f32 %v608, %v1171
        %v1204 = vadd.f32 %v611, %v1172
        %v1205 = vadd.f32 %v616, %v1173
        %v1206 = vadd.f32 %v619, %v1174
        %v1207 = vadd.f32 %v624, %v1175
        %v1208 = vadd.f32 %v627, %v1176
        %v1209 = vadd.f32 %v632, %v1177
        %v1210 = vadd.f32 %v635, %v1178
        %v1211 = vadd.f32 %v640, %v1179
        %v1212 = vadd.f32 %v643, %v1180
        %v1213 = vadd.f32 %v648, %v1181
        %v1214 = vadd.f32 %v651, %v1182
        %v1215 = vadd.f32 %v656, %v1183
        %v1216 = vadd.f32 %v659, %v1184
        %v1217 = vadd.f32 %v664, %v1185
        %v1218 = vadd.f32 %v667, %v1186
        %v1219 = vadd.f32 %v672, %v1187
        %v1220 = vadd.f32 %v675, %v1188
        %v1221 = vadd.f32 %v680, %v1189
        %v1222 = vadd.f32 %v683, %v1190
        %1223 = vmatprep.subr.mxu0 0.0
        %1224 = vmatpush1.msra.mxu0 %v1206
        %1225 = vmatprep.subr.mxu0 0.0
        %1226 = vmatpush1.msra.mxu0 %v1205
        %1227 = vmatprep.subr.mxu0 0.0
        %1228 = vmatpush1.msra.mxu0 %v1204
        %1229 = vmatprep.subr.mxu0 0.0
        %1230 = vmatpush1.msra.mxu0 %v1203
        %1231 = vmatprep.subr.mxu0 0.0
        %1232 = vmatpush1.msra.mxu0 %v1202
        %1233 = vmatprep.subr.mxu0 0.0
        %1234 = vmatpush1.msra.mxu0 %v1201
        %1235 = vmatprep.subr.mxu0 0.0
        %1236 = vmatpush1.msra.mxu0 %v1200
        %1237 = vmatprep.subr.mxu0 0.0
        %1238 = vmatpush1.msra.mxu0 %v1199
        %1239 = vmatprep.subr.mxu0 0.0
        %1240 = vmatpush1.msra.mxu0 %v1198
        %1241 = vmatprep.subr.mxu0 0.0
        %1242 = vmatpush1.msra.mxu0 %v1197
        %1243 = vmatprep.subr.mxu0 0.0
        %1244 = vmatpush1.msra.mxu0 %v1196
        %1245 = vmatprep.subr.mxu0 0.0
        %1246 = vmatpush1.msra.mxu0 %v1195
        %1247 = vmatprep.subr.mxu0 0.0
        %1248 = vmatpush1.msra.mxu0 %v1194
        %1249 = vmatprep.subr.mxu0 0.0
        %1250 = vmatpush1.msra.mxu0 %v1193
        %1251 = vmatprep.subr.mxu0 0.0
        %1252 = vmatpush1.msra.mxu0 %v1192
        %1253 = vmatprep.subr.mxu0 0.0
        %1254 = vmatpush1.msra.mxu0 %v1191
        %1255 = vmatprep.subr.mxu0 0.0
        %1256 = vmatpush2.msra.mxu0 %v1222
        %1257 = vmatprep.subr.mxu0 0.0
        %1258 = vmatpush2.msra.mxu0 %v1221
        %1259 = vmatprep.subr.mxu0 0.0
        %1260 = vmatpush2.msra.mxu0 %v1220
        %1261 = vmatprep.subr.mxu0 0.0
        %1262 = vmatpush2.msra.mxu0 %v1219
        %1263 = vmatprep.subr.mxu0 0.0
        %1264 = vmatpush2.msra.mxu0 %v1218
        %1265 = vmatprep.subr.mxu0 0.0
        %1266 = vmatpush2.msra.mxu0 %v1217
        %1267 = vmatprep.subr.mxu0 0.0
        %1268 = vmatpush2.msra.mxu0 %v1216
        %1269 = vmatprep.subr.mxu0 0.0
        %1270 = vmatpush2.msra.mxu0 %v1215
        %1271 = vmatprep.subr.mxu0 0.0
        %1272 = vmatpush2.msra.mxu0 %v1214
        %1273 = vmatprep.subr.mxu0 0.0
        %1274 = vmatpush2.msra.mxu0 %v1213
        %1275 = vmatprep.subr.mxu0 0.0
        %1276 = vmatpush2.msra.mxu0 %v1212
        %1277 = vmatprep.subr.mxu0 0.0
        %1278 = vmatpush2.msra.mxu0 %v1211
        %1279 = vmatprep.subr.mxu0 0.0
        %1280 = vmatpush2.msra.mxu0 %v1210
        %1281 = vmatprep.subr.mxu0 0.0
        %1282 = vmatpush2.msra.mxu0 %v1209
        %1283 = vmatprep.subr.mxu0 0.0
        %1284 = vmatpush2.msra.mxu0 %v1208
        %1285 = vmatprep.subr.mxu0 0.0
        %1286 = vmatpush2.msra.mxu0 %v1207
        %1287 = vmatprep.mubr.f32.mxu0 %v351
        %1288 = vmatmul.mubr.f32.gmra.mxu0 %v350
        %v1289 = vpop.f32.mrf.mxu0
        %v1290 = vadd.f32 0.0, %v1289
        %v1291 = vpop.f32.mrf.mxu0
        %1292 = vmatprep.mubr.f32.mxu0 %v353
        %1293 = vmatmul.mubr.f32.gmra.mxu0 %v352
        %v1294 = vpop.f32.mrf.mxu0
        %v1295 = vadd.f32 0.0, %v1294
        %v1296 = vpop.f32.mrf.mxu0
        %1297 = vmatprep.mubr.f32.mxu0 %v355
        %1298 = vmatmul.mubr.f32.gmra.mxu0 %v354
        %v1299 = vpop.f32.mrf.mxu0
        %v1300 = vadd.f32 0.0, %v1299
        %v1301 = vpop.f32.mrf.mxu0
        %1302 = vmatprep.mubr.f32.mxu0 %v357
        %1303 = vmatmul.mubr.f32.gmra.mxu0 %v356
        %v1304 = vpop.f32.mrf.mxu0
        %v1305 = vadd.f32 0.0, %v1304
        %v1306 = vpop.f32.mrf.mxu0
        %1307 = vmatprep.mubr.f32.mxu0 %v359
        %1308 = vmatmul.mubr.f32.gmra.mxu0 %v358
        %v1309 = vpop.f32.mrf.mxu0
        %v1310 = vadd.f32 0.0, %v1309
        %v1311 = vpop.f32.mrf.mxu0
        %1312 = vmatprep.mubr.f32.mxu0 %v361
        %1313 = vmatmul.mubr.f32.gmra.mxu0 %v360
        %v1314 = vpop.f32.mrf.mxu0
        %v1315 = vadd.f32 0.0, %v1314
        %v1316 = vpop.f32.mrf.mxu0
        %1317 = vmatprep.mubr.f32.mxu0 %v363
        %1318 = vmatmul.mubr.f32.gmra.mxu0 %v362
        %v1319 = vpop.f32.mrf.mxu0
        %v1320 = vadd.f32 0.0, %v1319
        %v1321 = vpop.f32.mrf.mxu0
        %1322 = vmatprep.mubr.f32.mxu0 %v365
        %1323 = vmatmul.mubr.f32.gmra.mxu0 %v364
        %v1324 = vpop.f32.mrf.mxu0
        %v1325 = vadd.f32 0.0, %v1324
        %v1326 = vpop.f32.mrf.mxu0
        %1327 = vmatprep.mubr.f32.mxu0 %v367
        %1328 = vmatmul.mubr.f32.gmra.mxu0 %v366
        %v1329 = vpop.f32.mrf.mxu0
        %v1330 = vadd.f32 0.0, %v1329
        %v1331 = vpop.f32.mrf.mxu0
        %1332 = vmatprep.mubr.f32.mxu0 %v369
        %1333 = vmatmul.mubr.f32.gmra.mxu0 %v368
        %v1334 = vpop.f32.mrf.mxu0
        %v1335 = vadd.f32 0.0, %v1334
        %v1336 = vpop.f32.mrf.mxu0
        %1337 = vmatprep.mubr.f32.mxu0 %v371
        %1338 = vmatmul.mubr.f32.gmra.mxu0 %v370
        %v1339 = vpop.f32.mrf.mxu0
        %v1340 = vadd.f32 0.0, %v1339
        %v1341 = vpop.f32.mrf.mxu0
        %1342 = vmatprep.mubr.f32.mxu0 %v373
        %1343 = vmatmul.mubr.f32.gmra.mxu0 %v372
        %v1344 = vpop.f32.mrf.mxu0
        %v1345 = vadd.f32 0.0, %v1344
        %v1346 = vpop.f32.mrf.mxu0
        %1347 = vmatprep.mubr.f32.mxu0 %v375
        %1348 = vmatmul.mubr.f32.gmra.mxu0 %v374
        %v1349 = vpop.f32.mrf.mxu0
        %v1350 = vadd.f32 0.0, %v1349
        %v1351 = vpop.f32.mrf.mxu0
        %1352 = vmatprep.mubr.f32.mxu0 %v377
        %1353 = vmatmul.mubr.f32.gmra.mxu0 %v376
        %v1354 = vpop.f32.mrf.mxu0
        %v1355 = vadd.f32 0.0, %v1354
        %v1356 = vpop.f32.mrf.mxu0
        %1357 = vmatprep.mubr.f32.mxu0 %v379
        %1358 = vmatmul.mubr.f32.gmra.mxu0 %v378
        %v1359 = vpop.f32.mrf.mxu0
        %v1360 = vadd.f32 0.0, %v1359
        %v1361 = vpop.f32.mrf.mxu0
        %1362 = vmatprep.mubr.f32.mxu0 %v381
        %1363 = vmatmul.mubr.f32.gmra.mxu0 %v380
        %v1364 = vpop.f32.mrf.mxu0
        %v1365 = vadd.f32 0.0, %v1364
        %v1366 = vpop.f32.mrf.mxu0
        %1367 = vmatprep.mubr.f32.mxu0 %v383
        %1368 = vmatmul.mubr.f32.gmra.mxu0 %v382
        %v1369 = vpop.f32.mrf.mxu0
        %v1370 = vadd.f32 0.0, %v1369
        %v1371 = vpop.f32.mrf.mxu0
        %1372 = vmatprep.mubr.f32.mxu0 %v385
        %1373 = vmatmul.mubr.f32.gmra.mxu0 %v384
        %v1374 = vpop.f32.mrf.mxu0
        %v1375 = vadd.f32 0.0, %v1374
        %v1376 = vpop.f32.mrf.mxu0
        %1377 = vmatprep.mubr.f32.mxu0 %v387
        %1378 = vmatmul.mubr.f32.gmra.mxu0 %v386
        %v1379 = vpop.f32.mrf.mxu0
        %v1380 = vadd.f32 0.0, %v1379
        %v1381 = vpop.f32.mrf.mxu0
        %1382 = vmatprep.mubr.f32.mxu0 %v389
        %1383 = vmatmul.mubr.f32.gmra.mxu0 %v388
        %v1384 = vpop.f32.mrf.mxu0
        %v1385 = vadd.f32 0.0, %v1384
        %v1386 = vpop.f32.mrf.mxu0
        %1387 = vmatprep.mubr.f32.mxu0 %v391
        %1388 = vmatmul.mubr.f32.gmra.mxu0 %v390
        %v1389 = vpop.f32.mrf.mxu0
        %v1390 = vadd.f32 0.0, %v1389
        %v1391 = vpop.f32.mrf.mxu0
        %1392 = vmatprep.mubr.f32.mxu0 %v393
        %1393 = vmatmul.mubr.f32.gmra.mxu0 %v392
        %v1394 = vpop.f32.mrf.mxu0
        %v1395 = vadd.f32 0.0, %v1394
        %v1396 = vpop.f32.mrf.mxu0
        %1397 = vmatprep.mubr.f32.mxu0 %v395
        %1398 = vmatmul.mubr.f32.gmra.mxu0 %v394
        %v1399 = vpop.f32.mrf.mxu0
        %v1400 = vadd.f32 0.0, %v1399
        %v1401 = vpop.f32.mrf.mxu0
        %1402 = vmatprep.mubr.f32.mxu0 %v397
        %1403 = vmatmul.mubr.f32.gmra.mxu0 %v396
        %v1404 = vpop.f32.mrf.mxu0
        %v1405 = vadd.f32 0.0, %v1404
        %v1406 = vpop.f32.mrf.mxu0
        %1407 = vmatprep.mubr.f32.mxu0 %v399
        %1408 = vmatmul.mubr.f32.gmra.mxu0 %v398
        %v1409 = vpop.f32.mrf.mxu0
        %v1410 = vadd.f32 0.0, %v1409
        %v1411 = vpop.f32.mrf.mxu0
        %1412 = vmatprep.mubr.f32.mxu0 %v401
        %1413 = vmatmul.mubr.f32.gmra.mxu0 %v400
        %v1414 = vpop.f32.mrf.mxu0
        %v1415 = vadd.f32 0.0, %v1414
        %v1416 = vpop.f32.mrf.mxu0
        %1417 = vmatprep.mubr.f32.mxu0 %v403
        %1418 = vmatmul.mubr.f32.gmra.mxu0 %v402
        %v1419 = vpop.f32.mrf.mxu0
        %v1420 = vadd.f32 0.0, %v1419
        %v1421 = vpop.f32.mrf.mxu0
        %1422 = vmatprep.mubr.f32.mxu0 %v405
        %1423 = vmatmul.mubr.f32.gmra.mxu0 %v404
        %v1424 = vpop.f32.mrf.mxu0
        %v1425 = vadd.f32 0.0, %v1424
        %v1426 = vpop.f32.mrf.mxu0
        %1427 = vmatprep.mubr.f32.mxu0 %v407
        %1428 = vmatmul.mubr.f32.gmra.mxu0 %v406
        %v1429 = vpop.f32.mrf.mxu0
        %v1430 = vadd.f32 0.0, %v1429
        %v1431 = vpop.f32.mrf.mxu0
        %1432 = vmatprep.mubr.f32.mxu0 %v409
        %1433 = vmatmul.mubr.f32.gmra.mxu0 %v408
        %v1434 = vpop.f32.mrf.mxu0
        %v1435 = vadd.f32 0.0, %v1434
        %v1436 = vpop.f32.mrf.mxu0
        %1437 = vmatprep.mubr.f32.mxu0 %v411
        %1438 = vmatmul.mubr.f32.gmra.mxu0 %v410
        %v1439 = vpop.f32.mrf.mxu0
        %v1440 = vadd.f32 0.0, %v1439
        %v1441 = vpop.f32.mrf.mxu0
        %1442 = vmatprep.mubr.f32.mxu0 %v413
        %1443 = vmatmul.mubr.f32.gmra.mxu0 %v412
        %v1444 = vpop.f32.mrf.mxu0
        %v1445 = vadd.f32 0.0, %v1444
        %v1446 = vpop.f32.mrf.mxu0
        %1447 = vdwg.mxu0
        %v1448 = vpack.c.bf16 %v1295, %v1290
        %v1449 = vpack.c.bf16 %v1305, %v1300
        %v1450 = vpack.c.bf16 %v1315, %v1310
        %v1451 = vpack.c.bf16 %v1325, %v1320
        %v1452 = vpack.c.bf16 %v1335, %v1330
        %v1453 = vpack.c.bf16 %v1345, %v1340
        %v1454 = vpack.c.bf16 %v1355, %v1350
        %v1455 = vpack.c.bf16 %v1365, %v1360
        %v1456 = vpack.c.bf16 %v1375, %v1370
        %v1457 = vpack.c.bf16 %v1385, %v1380
        %v1458 = vpack.c.bf16 %v1395, %v1390
        %v1459 = vpack.c.bf16 %v1405, %v1400
        %v1460 = vpack.c.bf16 %v1415, %v1410
        %v1461 = vpack.c.bf16 %v1425, %v1420
        %v1462 = vpack.c.bf16 %v1435, %v1430
        %v1463 = vpack.c.bf16 %v1445, %v1440
        %s1464 = scalar_lea.vmem %s4, 16
        %v1465 = vld [vmem:[%s1464] sm:$0xf]
        %v1466 = vld [vmem:[%s1464 + $0x4] sm:$0xf]
        %v1467 = vld [vmem:[%s1464 + $0x8] sm:$0xf]
        %v1468 = vld [vmem:[%s1464 + $0xc] sm:$0xf]
        %v1470 = vlaneseq
        %v1471 = vshrl.u32 %v1470, 7
        %v1472 = vsub.s32 0, %v1471
        %v1473 = vrot.slane %v416, %v1472
        %v1479 = vunpack.c.l.b16 %v1465
        %v1480 = vunpack.c.l.b16 %v1466
        %v1481 = vunpack.c.l.b16 %v1467
        %v1482 = vunpack.c.l.b16 %v1468
        %v1483 = vpack.c.b16 %v1480, %v1479
        %v1484 = vpack.c.b16 %v1482, %v1481
        %v1488 = vsel %vm949, %v1448, 0
        %v1491 = vsel %vm949, %v1449, 0
        %v1494 = vsel %vm949, %v1450, 0
        %v1497 = vsel %vm949, %v1451, 0
        %v1500 = vsel %vm949, %v1452, 0
        %v1503 = vsel %vm949, %v1453, 0
        %v1506 = vsel %vm949, %v1454, 0
        %v1509 = vsel %vm949, %v1455, 0
        %v1512 = vsel %vm949, %v1456, 0
        %v1515 = vsel %vm949, %v1457, 0
        %v1518 = vsel %vm949, %v1458, 0
        %v1521 = vsel %vm949, %v1459, 0
        %v1524 = vsel %vm949, %v1460, 0
        %v1527 = vsel %vm949, %v1461, 0
        %v1530 = vsel %vm949, %v1462, 0
        %v1533 = vsel %vm949, %v1463, 0
        %1535 = vmatprep.subr.bf16.mxu0 0
        %1536 = vmatpush1.bf16.msra.mxu0 0
        %1537 = vmatprep.subr.bf16.mxu0 0
        %1538 = vmatpush1.bf16.msra.mxu0 0
        %1539 = vmatprep.subr.bf16.mxu0 0
        %1540 = vmatpush1.bf16.msra.mxu0 0
        %1541 = vmatprep.subr.bf16.mxu0 0
        %1542 = vmatpush1.bf16.msra.mxu0 0
        %1543 = vmatprep.subr.bf16.mxu0 0
        %1544 = vmatpush1.bf16.msra.mxu0 0
        %1545 = vmatprep.subr.bf16.mxu0 0
        %1546 = vmatpush1.bf16.msra.mxu0 0
        %1547 = vmatprep.subr.bf16.mxu0 0
        %1548 = vmatpush1.bf16.msra.mxu0 %v1484
        %1549 = vmatprep.subr.bf16.mxu0 0
        %1550 = vmatpush1.bf16.msra.mxu0 %v1483
        %1551 = vmatprep.subr.bf16.mxu0 0
        %1552 = vmatpush2.bf16.msra.mxu0 0
        %1553 = vmatprep.subr.bf16.mxu0 0
        %1554 = vmatpush2.bf16.msra.mxu0 0
        %1555 = vmatprep.subr.bf16.mxu0 0
        %1556 = vmatpush2.bf16.msra.mxu0 0
        %1557 = vmatprep.subr.bf16.mxu0 0
        %1558 = vmatpush2.bf16.msra.mxu0 0
        %1559 = vmatprep.subr.bf16.mxu0 0
        %1560 = vmatpush2.bf16.msra.mxu0 0
        %1561 = vmatprep.subr.bf16.mxu0 0
        %1562 = vmatpush2.bf16.msra.mxu0 0
        %1563 = vmatprep.subr.bf16.mxu0 0
        %1564 = vmatpush2.bf16.msra.mxu0 0
        %1565 = vmatprep.subr.bf16.mxu0 0
        %1566 = vmatpush2.bf16.msra.mxu0 0
        %1567 = vmatprep.mubr.bf16.mxu0 0
        %1568 = vmatmul.mubr.bf16.gmra.mxu0 %v1488
        %v1569 = vpop.f32.mrf.mxu0
        %v1570 = vadd.f32 %v1473, %v1569
        %v1571 = vpop.f32.mrf.mxu0
        %v1572 = vpop.f32.mrf.mxu0
        %v1573 = vadd.f32 %v1473, %v1572
        %v1574 = vpop.f32.mrf.mxu0
        %1575 = vmatprep.mubr.bf16.mxu0 0
        %1576 = vmatmul.mubr.bf16.gmra.mxu0 %v1491
        %v1577 = vpop.f32.mrf.mxu0
        %v1578 = vadd.f32 %v1473, %v1577
        %v1579 = vpop.f32.mrf.mxu0
        %v1580 = vpop.f32.mrf.mxu0
        %v1581 = vadd.f32 %v1473, %v1580
        %v1582 = vpop.f32.mrf.mxu0
        %1583 = vmatprep.mubr.bf16.mxu0 0
        %1584 = vmatmul.mubr.bf16.gmra.mxu0 %v1494
        %v1585 = vpop.f32.mrf.mxu0
        %v1586 = vadd.f32 %v1473, %v1585
        %v1587 = vpop.f32.mrf.mxu0
        %v1588 = vpop.f32.mrf.mxu0
        %v1589 = vadd.f32 %v1473, %v1588
        %v1590 = vpop.f32.mrf.mxu0
        %1591 = vmatprep.mubr.bf16.mxu0 0
        %1592 = vmatmul.mubr.bf16.gmra.mxu0 %v1497
        %v1593 = vpop.f32.mrf.mxu0
        %v1594 = vadd.f32 %v1473, %v1593
        %v1595 = vpop.f32.mrf.mxu0
        %v1596 = vpop.f32.mrf.mxu0
        %v1597 = vadd.f32 %v1473, %v1596
        %v1598 = vpop.f32.mrf.mxu0
        %1599 = vmatprep.mubr.bf16.mxu0 0
        %1600 = vmatmul.mubr.bf16.gmra.mxu0 %v1500
        %v1601 = vpop.f32.mrf.mxu0
        %v1602 = vadd.f32 %v1473, %v1601
        %v1603 = vpop.f32.mrf.mxu0
        %v1604 = vpop.f32.mrf.mxu0
        %v1605 = vadd.f32 %v1473, %v1604
        %v1606 = vpop.f32.mrf.mxu0
        %1607 = vmatprep.mubr.bf16.mxu0 0
        %1608 = vmatmul.mubr.bf16.gmra.mxu0 %v1503
        %v1609 = vpop.f32.mrf.mxu0
        %v1610 = vadd.f32 %v1473, %v1609
        %v1611 = vpop.f32.mrf.mxu0
        %v1612 = vpop.f32.mrf.mxu0
        %v1613 = vadd.f32 %v1473, %v1612
        %v1614 = vpop.f32.mrf.mxu0
        %1615 = vmatprep.mubr.bf16.mxu0 0
        %1616 = vmatmul.mubr.bf16.gmra.mxu0 %v1506
        %v1617 = vpop.f32.mrf.mxu0
        %v1618 = vadd.f32 %v1473, %v1617
        %v1619 = vpop.f32.mrf.mxu0
        %v1620 = vpop.f32.mrf.mxu0
        %v1621 = vadd.f32 %v1473, %v1620
        %v1622 = vpop.f32.mrf.mxu0
        %1623 = vmatprep.mubr.bf16.mxu0 0
        %1624 = vmatmul.mubr.bf16.gmra.mxu0 %v1509
        %v1625 = vpop.f32.mrf.mxu0
        %v1626 = vadd.f32 %v1473, %v1625
        %v1627 = vpop.f32.mrf.mxu0
        %v1628 = vpop.f32.mrf.mxu0
        %v1629 = vadd.f32 %v1473, %v1628
        %v1630 = vpop.f32.mrf.mxu0
        %1631 = vmatprep.mubr.bf16.mxu0 0
        %1632 = vmatmul.mubr.bf16.gmra.mxu0 %v1512
        %v1633 = vpop.f32.mrf.mxu0
        %v1634 = vadd.f32 %v1473, %v1633
        %v1635 = vpop.f32.mrf.mxu0
        %v1636 = vpop.f32.mrf.mxu0
        %v1637 = vadd.f32 %v1473, %v1636
        %v1638 = vpop.f32.mrf.mxu0
        %1639 = vmatprep.mubr.bf16.mxu0 0
        %1640 = vmatmul.mubr.bf16.gmra.mxu0 %v1515
        %v1641 = vpop.f32.mrf.mxu0
        %v1642 = vadd.f32 %v1473, %v1641
        %v1643 = vpop.f32.mrf.mxu0
        %v1644 = vpop.f32.mrf.mxu0
        %v1645 = vadd.f32 %v1473, %v1644
        %v1646 = vpop.f32.mrf.mxu0
        %1647 = vmatprep.mubr.bf16.mxu0 0
        %1648 = vmatmul.mubr.bf16.gmra.mxu0 %v1518
        %v1649 = vpop.f32.mrf.mxu0
        %v1650 = vadd.f32 %v1473, %v1649
        %v1651 = vpop.f32.mrf.mxu0
        %v1652 = vpop.f32.mrf.mxu0
        %v1653 = vadd.f32 %v1473, %v1652
        %v1654 = vpop.f32.mrf.mxu0
        %1655 = vmatprep.mubr.bf16.mxu0 0
        %1656 = vmatmul.mubr.bf16.gmra.mxu0 %v1521
        %v1657 = vpop.f32.mrf.mxu0
        %v1658 = vadd.f32 %v1473, %v1657
        %v1659 = vpop.f32.mrf.mxu0
        %v1660 = vpop.f32.mrf.mxu0
        %v1661 = vadd.f32 %v1473, %v1660
        %v1662 = vpop.f32.mrf.mxu0
        %1663 = vmatprep.mubr.bf16.mxu0 0
        %1664 = vmatmul.mubr.bf16.gmra.mxu0 %v1524
        %v1665 = vpop.f32.mrf.mxu0
        %v1666 = vadd.f32 %v1473, %v1665
        %v1667 = vpop.f32.mrf.mxu0
        %v1668 = vpop.f32.mrf.mxu0
        %v1669 = vadd.f32 %v1473, %v1668
        %v1670 = vpop.f32.mrf.mxu0
        %1671 = vmatprep.mubr.bf16.mxu0 0
        %1672 = vmatmul.mubr.bf16.gmra.mxu0 %v1527
        %v1673 = vpop.f32.mrf.mxu0
        %v1674 = vadd.f32 %v1473, %v1673
        %v1675 = vpop.f32.mrf.mxu0
        %v1676 = vpop.f32.mrf.mxu0
        %v1677 = vadd.f32 %v1473, %v1676
        %v1678 = vpop.f32.mrf.mxu0
        %1679 = vmatprep.mubr.bf16.mxu0 0
        %1680 = vmatmul.mubr.bf16.gmra.mxu0 %v1530
        %v1681 = vpop.f32.mrf.mxu0
        %v1682 = vadd.f32 %v1473, %v1681
        %v1683 = vpop.f32.mrf.mxu0
        %v1684 = vpop.f32.mrf.mxu0
        %v1685 = vadd.f32 %v1473, %v1684
        %v1686 = vpop.f32.mrf.mxu0
        %1687 = vmatprep.mubr.bf16.mxu0 0
        %1688 = vmatmul.mubr.bf16.gmra.mxu0 %v1533
        %v1689 = vpop.f32.mrf.mxu0
        %v1690 = vadd.f32 %v1473, %v1689
        %v1691 = vpop.f32.mrf.mxu0
        %v1692 = vpop.f32.mrf.mxu0
        %v1693 = vadd.f32 %v1473, %v1692
        %v1694 = vpop.f32.mrf.mxu0
        %1695 = vdwg.mxu0
        %v1696 = vmax.f32 %v1570, 0.0
        %v1697 = vmax.f32 %v1573, 0.0
        %v1698 = vmax.f32 %v1578, 0.0
        %v1699 = vmax.f32 %v1581, 0.0
        %v1700 = vmax.f32 %v1586, 0.0
        %v1701 = vmax.f32 %v1589, 0.0
        %v1702 = vmax.f32 %v1594, 0.0
        %v1703 = vmax.f32 %v1597, 0.0
        %v1704 = vmax.f32 %v1602, 0.0
        %v1705 = vmax.f32 %v1605, 0.0
        %v1706 = vmax.f32 %v1610, 0.0
        %v1707 = vmax.f32 %v1613, 0.0
        %v1708 = vmax.f32 %v1618, 0.0
        %v1709 = vmax.f32 %v1621, 0.0
        %v1710 = vmax.f32 %v1626, 0.0
        %v1711 = vmax.f32 %v1629, 0.0
        %v1712 = vmax.f32 %v1634, 0.0
        %v1713 = vmax.f32 %v1637, 0.0
        %v1714 = vmax.f32 %v1642, 0.0
        %v1715 = vmax.f32 %v1645, 0.0
        %v1716 = vmax.f32 %v1650, 0.0
        %v1717 = vmax.f32 %v1653, 0.0
        %v1718 = vmax.f32 %v1658, 0.0
        %v1719 = vmax.f32 %v1661, 0.0
        %v1720 = vmax.f32 %v1666, 0.0
        %v1721 = vmax.f32 %v1669, 0.0
        %v1722 = vmax.f32 %v1674, 0.0
        %v1723 = vmax.f32 %v1677, 0.0
        %v1724 = vmax.f32 %v1682, 0.0
        %v1725 = vmax.f32 %v1685, 0.0
        %v1726 = vmax.f32 %v1690, 0.0
        %v1727 = vmax.f32 %v1693, 0.0
        %v1728 = vadd.f32 %v1191, %v1696
        %v1729 = vadd.f32 %v1192, %v1697
        %v1730 = vadd.f32 %v1193, %v1698
        %v1731 = vadd.f32 %v1194, %v1699
        %v1732 = vadd.f32 %v1195, %v1700
        %v1733 = vadd.f32 %v1196, %v1701
        %v1734 = vadd.f32 %v1197, %v1702
        %v1735 = vadd.f32 %v1198, %v1703
        %v1736 = vadd.f32 %v1199, %v1704
        %v1737 = vadd.f32 %v1200, %v1705
        %v1738 = vadd.f32 %v1201, %v1706
        %v1739 = vadd.f32 %v1202, %v1707
        %v1740 = vadd.f32 %v1203, %v1708
        %v1741 = vadd.f32 %v1204, %v1709
        %v1742 = vadd.f32 %v1205, %v1710
        %v1743 = vadd.f32 %v1206, %v1711
        %v1744 = vadd.f32 %v1207, %v1712
        %v1745 = vadd.f32 %v1208, %v1713
        %v1746 = vadd.f32 %v1209, %v1714
        %v1747 = vadd.f32 %v1210, %v1715
        %v1748 = vadd.f32 %v1211, %v1716
        %v1749 = vadd.f32 %v1212, %v1717
        %v1750 = vadd.f32 %v1213, %v1718
        %v1751 = vadd.f32 %v1214, %v1719
        %v1752 = vadd.f32 %v1215, %v1720
        %v1753 = vadd.f32 %v1216, %v1721
        %v1754 = vadd.f32 %v1217, %v1722
        %v1755 = vadd.f32 %v1218, %v1723
        %v1756 = vadd.f32 %v1219, %v1724
        %v1757 = vadd.f32 %v1220, %v1725
        %v1758 = vadd.f32 %v1221, %v1726
        %v1759 = vadd.f32 %v1222, %v1727
        %v1760 = vpack.c.bf16 %v1729, %v1728
        %v1761 = vpack.c.bf16 %v1731, %v1730
        %v1762 = vpack.c.bf16 %v1733, %v1732
        %v1763 = vpack.c.bf16 %v1735, %v1734
        %v1764 = vpack.c.bf16 %v1737, %v1736
        %v1765 = vpack.c.bf16 %v1739, %v1738
        %v1766 = vpack.c.bf16 %v1741, %v1740
        %v1767 = vpack.c.bf16 %v1743, %v1742
        %v1768 = vpack.c.bf16 %v1745, %v1744
        %v1769 = vpack.c.bf16 %v1747, %v1746
        %v1770 = vpack.c.bf16 %v1749, %v1748
        %v1771 = vpack.c.bf16 %v1751, %v1750
        %v1772 = vpack.c.bf16 %v1753, %v1752
        %v1773 = vpack.c.bf16 %v1755, %v1754
        %v1774 = vpack.c.bf16 %v1757, %v1756
        %v1775 = vpack.c.bf16 %v1759, %v1758
        %v1776 = vld [vmem:[%s6] sm:$0xf]
        %v1777 = vld [vmem:[%s6 + $0x4] sm:$0xf]
        %v1778 = vld [vmem:[%s6 + $0x8] sm:$0xf]
        %v1779 = vld [vmem:[%s6 + $0xc] sm:$0xf]
        %v1780 = vld [vmem:[%s7] sm:$0x1]
        %v1782 = vlaneseq
        %v1783 = vshrl.u32 %v1782, 7
        %v1784 = vsub.s32 0, %v1783
        %v1785 = vrot.slane %v1780, %v1784
        %v1791 = vunpack.c.l.b16 %v1776
        %v1792 = vunpack.c.l.b16 %v1777
        %v1793 = vunpack.c.l.b16 %v1778
        %v1794 = vunpack.c.l.b16 %v1779
        %v1795 = vpack.c.b16 %v1792, %v1791
        %v1796 = vpack.c.b16 %v1794, %v1793
        %v1800 = vsel %vm949, %v1760, 0
        %v1803 = vsel %vm949, %v1761, 0
        %v1806 = vsel %vm949, %v1762, 0
        %v1809 = vsel %vm949, %v1763, 0
        %v1812 = vsel %vm949, %v1764, 0
        %v1815 = vsel %vm949, %v1765, 0
        %v1818 = vsel %vm949, %v1766, 0
        %v1821 = vsel %vm949, %v1767, 0
        %v1824 = vsel %vm949, %v1768, 0
        %v1827 = vsel %vm949, %v1769, 0
        %v1830 = vsel %vm949, %v1770, 0
        %v1833 = vsel %vm949, %v1771, 0
        %v1836 = vsel %vm949, %v1772, 0
        %v1839 = vsel %vm949, %v1773, 0
        %v1842 = vsel %vm949, %v1774, 0
        %v1845 = vsel %vm949, %v1775, 0
        %1847 = vmatprep.subr.bf16.mxu0 0
        %1848 = vmatpush1.bf16.msra.mxu0 0
        %1849 = vmatprep.subr.bf16.mxu0 0
        %1850 = vmatpush1.bf16.msra.mxu0 0
        %1851 = vmatprep.subr.bf16.mxu0 0
        %1852 = vmatpush1.bf16.msra.mxu0 0
        %1853 = vmatprep.subr.bf16.mxu0 0
        %1854 = vmatpush1.bf16.msra.mxu0 0
        %1855 = vmatprep.subr.bf16.mxu0 0
        %1856 = vmatpush1.bf16.msra.mxu0 0
        %1857 = vmatprep.subr.bf16.mxu0 0
        %1858 = vmatpush1.bf16.msra.mxu0 0
        %1859 = vmatprep.subr.bf16.mxu0 0
        %1860 = vmatpush1.bf16.msra.mxu0 %v1796
        %1861 = vmatprep.subr.bf16.mxu0 0
        %1862 = vmatpush1.bf16.msra.mxu0 %v1795
        %1863 = vmatprep.subr.bf16.mxu0 0
        %1864 = vmatpush2.bf16.msra.mxu0 0
        %1865 = vmatprep.subr.bf16.mxu0 0
        %1866 = vmatpush2.bf16.msra.mxu0 0
        %1867 = vmatprep.subr.bf16.mxu0 0
        %1868 = vmatpush2.bf16.msra.mxu0 0
        %1869 = vmatprep.subr.bf16.mxu0 0
        %1870 = vmatpush2.bf16.msra.mxu0 0
        %1871 = vmatprep.subr.bf16.mxu0 0
        %1872 = vmatpush2.bf16.msra.mxu0 0
        %1873 = vmatprep.subr.bf16.mxu0 0
        %1874 = vmatpush2.bf16.msra.mxu0 0
        %1875 = vmatprep.subr.bf16.mxu0 0
        %1876 = vmatpush2.bf16.msra.mxu0 0
        %1877 = vmatprep.subr.bf16.mxu0 0
        %1878 = vmatpush2.bf16.msra.mxu0 0
        %1879 = vmatprep.mubr.bf16.mxu0 0
        %1880 = vmatmul.mubr.bf16.gmra.mxu0 %v1800
        %v1881 = vpop.f32.mrf.mxu0
        %v1882 = vadd.f32 %v1785, %v1881
        %v1883 = vpop.f32.mrf.mxu0
        %v1884 = vpop.f32.mrf.mxu0
        %v1885 = vadd.f32 %v1785, %v1884
        %v1886 = vpop.f32.mrf.mxu0
        %1887 = vmatprep.mubr.bf16.mxu0 0
        %1888 = vmatmul.mubr.bf16.gmra.mxu0 %v1803
        %v1889 = vpop.f32.mrf.mxu0
        %v1890 = vadd.f32 %v1785, %v1889
        %v1891 = vpop.f32.mrf.mxu0
        %v1892 = vpop.f32.mrf.mxu0
        %v1893 = vadd.f32 %v1785, %v1892
        %v1894 = vpop.f32.mrf.mxu0
        %1895 = vmatprep.mubr.bf16.mxu0 0
        %1896 = vmatmul.mubr.bf16.gmra.mxu0 %v1806
        %v1897 = vpop.f32.mrf.mxu0
        %v1898 = vadd.f32 %v1785, %v1897
        %v1899 = vpop.f32.mrf.mxu0
        %v1900 = vpop.f32.mrf.mxu0
        %v1901 = vadd.f32 %v1785, %v1900
        %v1902 = vpop.f32.mrf.mxu0
        %1903 = vmatprep.mubr.bf16.mxu0 0
        %1904 = vmatmul.mubr.bf16.gmra.mxu0 %v1809
        %v1905 = vpop.f32.mrf.mxu0
        %v1906 = vadd.f32 %v1785, %v1905
        %v1907 = vpop.f32.mrf.mxu0
        %v1908 = vpop.f32.mrf.mxu0
        %v1909 = vadd.f32 %v1785, %v1908
        %v1910 = vpop.f32.mrf.mxu0
        %1911 = vmatprep.mubr.bf16.mxu0 0
        %1912 = vmatmul.mubr.bf16.gmra.mxu0 %v1812
        %v1913 = vpop.f32.mrf.mxu0
        %v1914 = vadd.f32 %v1785, %v1913
        %v1915 = vpop.f32.mrf.mxu0
        %v1916 = vpop.f32.mrf.mxu0
        %v1917 = vadd.f32 %v1785, %v1916
        %v1918 = vpop.f32.mrf.mxu0
        %1919 = vmatprep.mubr.bf16.mxu0 0
        %1920 = vmatmul.mubr.bf16.gmra.mxu0 %v1815
        %v1921 = vpop.f32.mrf.mxu0
        %v1922 = vadd.f32 %v1785, %v1921
        %v1923 = vpop.f32.mrf.mxu0
        %v1924 = vpop.f32.mrf.mxu0
        %v1925 = vadd.f32 %v1785, %v1924
        %v1926 = vpop.f32.mrf.mxu0
        %1927 = vmatprep.mubr.bf16.mxu0 0
        %1928 = vmatmul.mubr.bf16.gmra.mxu0 %v1818
        %v1929 = vpop.f32.mrf.mxu0
        %v1930 = vadd.f32 %v1785, %v1929
        %v1931 = vpop.f32.mrf.mxu0
        %v1932 = vpop.f32.mrf.mxu0
        %v1933 = vadd.f32 %v1785, %v1932
        %v1934 = vpop.f32.mrf.mxu0
        %1935 = vmatprep.mubr.bf16.mxu0 0
        %1936 = vmatmul.mubr.bf16.gmra.mxu0 %v1821
        %v1937 = vpop.f32.mrf.mxu0
        %v1938 = vadd.f32 %v1785, %v1937
        %v1939 = vpop.f32.mrf.mxu0
        %v1940 = vpop.f32.mrf.mxu0
        %v1941 = vadd.f32 %v1785, %v1940
        %v1942 = vpop.f32.mrf.mxu0
        %1943 = vmatprep.mubr.bf16.mxu0 0
        %1944 = vmatmul.mubr.bf16.gmra.mxu0 %v1824
        %v1945 = vpop.f32.mrf.mxu0
        %v1946 = vadd.f32 %v1785, %v1945
        %v1947 = vpop.f32.mrf.mxu0
        %v1948 = vpop.f32.mrf.mxu0
        %v1949 = vadd.f32 %v1785, %v1948
        %v1950 = vpop.f32.mrf.mxu0
        %1951 = vmatprep.mubr.bf16.mxu0 0
        %1952 = vmatmul.mubr.bf16.gmra.mxu0 %v1827
        %v1953 = vpop.f32.mrf.mxu0
        %v1954 = vadd.f32 %v1785, %v1953
        %v1955 = vpop.f32.mrf.mxu0
        %v1956 = vpop.f32.mrf.mxu0
        %v1957 = vadd.f32 %v1785, %v1956
        %v1958 = vpop.f32.mrf.mxu0
        %1959 = vmatprep.mubr.bf16.mxu0 0
        %1960 = vmatmul.mubr.bf16.gmra.mxu0 %v1830
        %v1961 = vpop.f32.mrf.mxu0
        %v1962 = vadd.f32 %v1785, %v1961
        %v1963 = vpop.f32.mrf.mxu0
        %v1964 = vpop.f32.mrf.mxu0
        %v1965 = vadd.f32 %v1785, %v1964
        %v1966 = vpop.f32.mrf.mxu0
        %1967 = vmatprep.mubr.bf16.mxu0 0
        %1968 = vmatmul.mubr.bf16.gmra.mxu0 %v1833
        %v1969 = vpop.f32.mrf.mxu0
        %v1970 = vadd.f32 %v1785, %v1969
        %v1971 = vpop.f32.mrf.mxu0
        %v1972 = vpop.f32.mrf.mxu0
        %v1973 = vadd.f32 %v1785, %v1972
        %v1974 = vpop.f32.mrf.mxu0
        %1975 = vmatprep.mubr.bf16.mxu0 0
        %1976 = vmatmul.mubr.bf16.gmra.mxu0 %v1836
        %v1977 = vpop.f32.mrf.mxu0
        %v1978 = vadd.f32 %v1785, %v1977
        %v1979 = vpop.f32.mrf.mxu0
        %v1980 = vpop.f32.mrf.mxu0
        %v1981 = vadd.f32 %v1785, %v1980
        %v1982 = vpop.f32.mrf.mxu0
        %1983 = vmatprep.mubr.bf16.mxu0 0
        %1984 = vmatmul.mubr.bf16.gmra.mxu0 %v1839
        %v1985 = vpop.f32.mrf.mxu0
        %v1986 = vadd.f32 %v1785, %v1985
        %v1987 = vpop.f32.mrf.mxu0
        %v1988 = vpop.f32.mrf.mxu0
        %v1989 = vadd.f32 %v1785, %v1988
        %v1990 = vpop.f32.mrf.mxu0
        %1991 = vmatprep.mubr.bf16.mxu0 0
        %1992 = vmatmul.mubr.bf16.gmra.mxu0 %v1842
        %v1993 = vpop.f32.mrf.mxu0
        %v1994 = vadd.f32 %v1785, %v1993
        %v1995 = vpop.f32.mrf.mxu0
        %v1996 = vpop.f32.mrf.mxu0
        %v1997 = vadd.f32 %v1785, %v1996
        %v1998 = vpop.f32.mrf.mxu0
        %1999 = vmatprep.mubr.bf16.mxu0 0
        %2000 = vmatmul.mubr.bf16.gmra.mxu0 %v1845
        %v2001 = vpop.f32.mrf.mxu0
        %v2002 = vadd.f32 %v1785, %v2001
        %v2003 = vpop.f32.mrf.mxu0
        %v2004 = vpop.f32.mrf.mxu0
        %v2005 = vadd.f32 %v1785, %v2004
        %v2006 = vpop.f32.mrf.mxu0
        %2007 = vdwg.mxu0
        %2008 = vst [vmem:[%s340] sm:$0xff] %v1882
        %2009 = vst [vmem:[%s340 + $0x8] sm:$0xff] %v1885
        %2010 = vst [vmem:[%s340 + $0x10] sm:$0xff] %v1890
        %2011 = vst [vmem:[%s340 + $0x18] sm:$0xff] %v1893
        %2012 = vst [vmem:[%s340 + $0x20] sm:$0xff] %v1898
        %2013 = vst [vmem:[%s340 + $0x28] sm:$0xff] %v1901
        %2014 = vst [vmem:[%s340 + $0x30] sm:$0xff] %v1906
        %2015 = vst [vmem:[%s340 + $0x38] sm:$0xff] %v1909
        %2016 = vst [vmem:[%s340 + $0x40] sm:$0xff] %v1914
        %2017 = vst [vmem:[%s340 + $0x48] sm:$0xff] %v1917
        %2018 = vst [vmem:[%s340 + $0x50] sm:$0xff] %v1922
        %2019 = vst [vmem:[%s340 + $0x58] sm:$0xff] %v1925
        %2020 = vst [vmem:[%s340 + $0x60] sm:$0xff] %v1930
        %2021 = vst [vmem:[%s340 + $0x68] sm:$0xff] %v1933
        %2022 = vst [vmem:[%s340 + $0x70] sm:$0xff] %v1938
        %2023 = vst [vmem:[%s340 + $0x78] sm:$0xff] %v1941
        %2024 = vst [vmem:[%s340 + $0x80] sm:$0xff] %v1946
        %2025 = vst [vmem:[%s340 + $0x88] sm:$0xff] %v1949
        %2026 = vst [vmem:[%s340 + $0x90] sm:$0xff] %v1954
        %2027 = vst [vmem:[%s340 + $0x98] sm:$0xff] %v1957
        %2028 = vst [vmem:[%s340 + $0xa0] sm:$0xff] %v1962
        %2029 = vst [vmem:[%s340 + $0xa8] sm:$0xff] %v1965
        %2030 = vst [vmem:[%s340 + $0xb0] sm:$0xff] %v1970
        %2031 = vst [vmem:[%s340 + $0xb8] sm:$0xff] %v1973
        %2032 = vst [vmem:[%s340 + $0xc0] sm:$0xff] %v1978
        %2033 = vst [vmem:[%s340 + $0xc8] sm:$0xff] %v1981
        %2034 = vst [vmem:[%s340 + $0xd0] sm:$0xff] %v1986
        %2035 = vst [vmem:[%s340 + $0xd8] sm:$0xff] %v1989
        %2036 = vst [vmem:[%s340 + $0xe0] sm:$0xff] %v1994
        %2037 = vst [vmem:[%s340 + $0xe8] sm:$0xff] %v1997
        %2038 = vst [vmem:[%s340 + $0xf0] sm:$0xff] %v2002
        %2039 = vst [vmem:[%s340 + $0xf8] sm:$0xff] %v2005
        %s2040 = sand.u32 %s211, 1
        %s2041 = scalar_lea.sflag [#allocation4], %s2040
        %s2042 = sand.u32 %s211, 1
        %s2043 = smul.addr %s2042, 256
        %s2044 = scalar_lea.vmem [#allocation5], %s2043
        // Predicated region
        $region57: #{tpu_custom_call.1} parent=51 // pred_check
          %p2045 = pneg %p221
        $region58: #{tpu_custom_call.1} parent=51 // pred_check_branch
          %2047 = sbr.rel (%p2045) target = $region60
        $region59: #{tpu_custom_call.1} parent=51 // pred_region
          %s2048 = smul.u32 32, %s25
          %s2050 = ssub.s32 4096, 4096
          %2051 = vsyncadd %s2041, %s2050
          %s2052 = smul.addr %s2048, 128
          %s2053 = scalar_lea.hbm %s8, %s2052
          %s2054 = sshll.u32 %s2044, 4
          %s2055 = int_to_ptr.vmem [resolvable:$true] %s2054
          %2060 = dma.vmem_to_hbm [thread:$0]  %s2055, 4096, %s2053, %s2041, 128, 128, 8
        $region60: #{tpu_custom_call.1} parent=51 // pred_fallthru
          _
      $region52: #{tpu_custom_call.1} parent=5 // pred_fallthru
        _
      %p2061 = scmp.le.s32.totalorder 2, %s20
      // Predicated region
      $region61: #{tpu_custom_call.1} parent=5 // pred_check
        %p2062 = pneg %p2061
      $region62: #{tpu_custom_call.1} parent=5 // pred_check_branch
        %2064 = sbr.rel (%p2062) target = $region64
      $region63: #{tpu_custom_call.1} parent=5 // pred_region
        %s2065 = ssub.s32 %s20, 2
        // Predicated region
        $region65: #{tpu_custom_call.1} parent=63 // pred_check
          %p2066 = pneg %p227
        $region66: #{tpu_custom_call.1} parent=63 // pred_check_branch
          %2068 = sbr.rel (%p2066) target = $region68
        $region67: #{tpu_custom_call.1} parent=63 // pred_region
          %s2069 = sand.u32 %s212, 1
          %s2070 = scalar_lea.sflag [#allocation4], %s2069
          %s2071 = sand.u32 %s212, 1
          %s2072 = smul.addr %s2071, 256
          %s2073 = scalar_lea.vmem [#allocation5], %s2072
          %2074 = dma.done %s2070, 4096
        $region68: #{tpu_custom_call.1} parent=63 // pred_fallthru
          _
      $region64: #{tpu_custom_call.1} parent=5 // pred_fallthru
        _
    $region6: #{tpu_custom_call.1} parent=1 // loop_footer
      %s24 = sadd.s32 1, %s20
    $region7: #{tpu_custom_call.1} parent=1 // loop_footer_branch
      %19 = sbr.rel target = $region3
    $region8: #{tpu_custom_call.1} parent=1 // loop_exit
      _
    %2075 = vsyncpa [#allocation3], 1
    %s2076 = scalar_lea.sflag [#allocation3], 1
    %2077 = vsyncpa %s2076, 1
    %2078 = vsyncpa [#allocation4], 1
    %s2079 = scalar_lea.sflag [#allocation4], 1
    %2080 = vsyncpa %s2079, 1

</llo_original>
